<compile_context>
chip_gen: v7x
topology: tpu7x:2x2x1
jax: 0.10.0
libtpu: 0.0.40
codegen_flags: <defaults>
</compile_context>

<pallas_src>
import functools
import math

import jax
import jax.numpy as jnp
from jax.experimental import pallas as pl
from jax.experimental.pallas import tpu as pltpu


def _gelu(x):
    return jax.nn.gelu(x, approximate=True)


# ------------------------------ fused kernel -------------------------------

def _fused_forward_kernel(at_ref, w_at_ref, b_at_ref,
                          p_ref, pool_ref, vw1_ref, vb1_ref, vw2_ref, vb2_ref,
                          wqkv_ref, bqkv_ref, mask_ref,
                          fcw_ref, fcb_ref,
                          o_ref,
                          x_scr, attn_scr,
                          *, B, heads, d_head, coa_d):
    f32 = jnp.float32

    # --- proj_a + proj_t fused: one block-diagonal matmul, (B, 2*coa_d) lane-dense.
    at = jnp.dot(at_ref[...], w_at_ref[...], preferred_element_type=f32) + b_at_ref[...]
    at = _gelu(at)

    # --- visual encoder: mean-pool raw patches first (valid by linearity of the
    #     patch embedding), then patch-linear -> linear -> GELU.
    pooled_p = jnp.dot(pool_ref[...], p_ref[...], preferred_element_type=f32)   # (B, patch_dim)
    pe = jnp.dot(pooled_p, vw1_ref[...], preferred_element_type=f32) + vb1_ref[...]
    v_feat = _gelu(jnp.dot(pe, vw2_ref[...], preferred_element_type=f32) + vb2_ref[...])

    # --- stack the 3 modality tokens (modality-major rows) in VMEM scratch.
    x_scr[0:B, :] = at[:, :coa_d]          # 'a' tokens
    x_scr[B:2 * B, :] = v_feat             # 'v' tokens
    x_scr[2 * B:3 * B, :] = at[:, coa_d:]  # 't' tokens
    x = x_scr[...]                         # (B*3, coa_d)

    # --- fused Q/K/V projection: one (BS, D) @ (D, 3D) matmul.
    qkv = jnp.dot(x, wqkv_ref[...], preferred_element_type=f32) + bqkv_ref[...]

    scale = 1.0 / math.sqrt(d_head)
    mask = mask_ref[...]                   # additive mask; blocks cross-batch attention
    for h in range(heads):                 # static unroll; heads is small
        lo = h * d_head
        qh = qkv[:, lo:lo + d_head]
        kh = qkv[:, coa_d + lo:coa_d + lo + d_head]
        vh = qkv[:, 2 * coa_d + lo:2 * coa_d + lo + d_head]
        s = jax.lax.dot_general(qh, kh, (((1,), (1,)), ((), ())),
                                preferred_element_type=f32) * scale + mask
        s = s - jnp.max(s, axis=-1, keepdims=True)
        p = jnp.exp(s)
        p = p * pl.reciprocal(jnp.sum(p, axis=-1, keepdims=True), approx=True)
        attn_scr[:, lo:lo + d_head] = jnp.dot(p, vh, preferred_element_type=f32)

    # --- fused (wo -> fc) + sigmoid; fc is padded to 128 lanes -> unmasked stores.
    out = jnp.dot(attn_scr[...], fcw_ref[...], preferred_element_type=f32) + fcb_ref[...]
    o_ref[...] = jax.nn.sigmoid(out).astype(o_ref.dtype)


# ------------------------------ glue (plain JAX) ---------------------------

def patchify(v, patch_size):
    """v: (B, img_num, C, H, W) -> (B, img_num * nh * nw, C * p * p)."""
    B, N, C, H, W = v.shape
    p = patch_size
    nh, nw = H // p, W // p
    x = v.reshape(B, N, C, nh, p, nw, p)
    x = x.transpose(0, 1, 3, 5, 2, 4, 6)
    return x.reshape(B, N * nh * nw, C * p * p)


def personality_forward_pallas(params, a, v, t, *, heads, patch_size):
    B, a_dim = a.shape
    t_dim = t.shape[1]
    coa_d = params["a_w"].shape[1]
    out_d = params["fc_w"].shape[1]
    d_head = coa_d // heads
    S = 3
    BS = B * S

    # --- input / weight packing (tiny XLA ops fused around the single kernel) ---
    patches = patchify(v, patch_size)                    # (B, P, patch_dim)
    _, P, pd = patches.shape
    p_flat = patches.reshape(B * P, pd)

    at_cat = jnp.concatenate([a, t], axis=1)             # (B, a_dim + t_dim)
    w_at = jnp.zeros((a_dim + t_dim, 2 * coa_d), jnp.float32)
    w_at = w_at.at[:a_dim, :coa_d].set(params["a_w"])
    w_at = w_at.at[a_dim:, coa_d:].set(params["t_w"])
    b_at = jnp.concatenate([params["a_b"], params["t_b"]]).reshape(1, 2 * coa_d)

    pool = jnp.repeat(jnp.eye(B, dtype=jnp.float32), P, axis=1) / P    # (B, B*P)

    w_qkv = jnp.concatenate([params["wq"], params["wk"], params["wv"]], axis=1)
    b_qkv = jnp.concatenate([params["bq"], params["bk"], params["bv"]]).reshape(1, 3 * coa_d)

    # Additive mask: tokens only attend within their own batch element.
    idx = jnp.arange(BS) % B
    mask = jnp.where(idx[:, None] == idx[None, :], 0.0, -1e30).astype(jnp.float32)

    # Fold the co-attention output projection into the fc layer, lane-dense padded.
    NPAD = max(128, ((out_d + 127) // 128) * 128)
    fc_w_pad = jnp.zeros((coa_d, NPAD), jnp.float32).at[:, :out_d].set(params["fc_w"])
    fc_b_pad = jnp.zeros((1, NPAD), jnp.float32).at[:, :out_d].set(params["fc_b"].reshape(1, -1))
    fused_fc_w = params["wo"] @ fc_w_pad                                       # (coa_d, NPAD)
    fused_fc_b = params["bo"].reshape(1, -1) @ fc_w_pad + fc_b_pad             # (1, NPAD)

    inputs = [
        at_cat, w_at, b_at,
        p_flat, pool,
        params["v_w1"], params["v_b1"].reshape(1, -1),
        params["v_w2"], params["v_b2"].reshape(1, -1),
        w_qkv, b_qkv, mask,
        fused_fc_w, fused_fc_b,
    ]

    def _full(shape):
        return pl.BlockSpec(shape, lambda i: (0,) * len(shape))

    kernel = functools.partial(_fused_forward_kernel,
                               B=B, heads=heads, d_head=d_head, coa_d=coa_d)

    out_pad = pl.pallas_call(
        kernel,
        out_shape=jax.ShapeDtypeStruct((BS, NPAD), jnp.float32),
        grid=(1,),
        in_specs=[_full(x.shape) for x in inputs],
        out_specs=pl.BlockSpec((BS, NPAD), lambda i: (0, 0)),
        scratch_shapes=[
            pltpu.VMEM((BS, coa_d), jnp.float32),   # stacked modality tokens
            pltpu.VMEM((BS, coa_d), jnp.float32),   # per-head attention outputs
        ],
        compiler_params=pltpu.CompilerParams(dimension_semantics=("arbitrary",)),
    )(*inputs)

    # Rows are modality-major (a tokens for all b, then v, then t); restore (B, 3, out_d).
    out = out_pad[:, :out_d].reshape(S, B, out_d).transpose(1, 0, 2)
    return out


def init_params(key, a_dim, t_dim, v_patch_size, heads, patch_out_d, coa_d, out_d):
    patch_dim = 3 * v_patch_size * v_patch_size
    ks = jax.random.split(key, 16)

    def w(k, shape, scale=0.02):
        return (scale * jax.random.normal(k, shape)).astype(jnp.float32)

    return dict(
        a_w=w(ks[0], (a_dim, coa_d)), a_b=w(ks[1], (coa_d,)),
        t_w=w(ks[2], (t_dim, coa_d)), t_b=w(ks[3], (coa_d,)),
        v_w1=w(ks[4], (patch_dim, patch_out_d)), v_b1=w(ks[5], (patch_out_d,)),
        v_w2=w(ks[6], (patch_out_d, coa_d)), v_b2=w(ks[7], (coa_d,)),
        wq=w(ks[8], (coa_d, coa_d)), bq=w(ks[9], (coa_d,)),
        wk=w(ks[10], (coa_d, coa_d)), bk=w(ks[11], (coa_d,)),
        wv=w(ks[12], (coa_d, coa_d)), bv=w(ks[13], (coa_d,)),
        wo=w(ks[14], (coa_d, coa_d)), bo=jnp.zeros((coa_d,), jnp.float32),
        fc_w=w(ks[15], (coa_d, out_d)), fc_b=jnp.zeros((out_d,), jnp.float32),
    )


def personality_forward_ref(params, a, v, t, *, heads, patch_size):
    """Pure-JAX reference with identical math (for correctness check)."""
    lin = lambda x, w, b: x @ w + b
    a_p = _gelu(lin(a, params["a_w"], params["a_b"]))
    t_p = _gelu(lin(t, params["t_w"], params["t_b"]))
    patches = patchify(v, patch_size)
    emb = jnp.einsum("bpd,de->bpe", patches, params["v_w1"]) + params["v_b1"]
    v_p = _gelu(lin(emb.mean(axis=1), params["v_w2"], params["v_b2"]))
    x = jnp.stack((a_p, v_p, t_p), axis=1)
    B, S, D = x.shape
    dh = D // heads
    q = lin(x, params["wq"], params["bq"]).reshape(B, S, heads, dh).transpose(0, 2, 1, 3)
    k = lin(x, params["wk"], params["bk"]).reshape(B, S, heads, dh).transpose(0, 2, 1, 3)
    vv = lin(x, params["wv"], params["bv"]).reshape(B, S, heads, dh).transpose(0, 2, 1, 3)
    s = jnp.einsum("bhqd,bhkd->bhqk", q, k) / math.sqrt(dh)
    p = jax.nn.softmax(s, axis=-1)
    att = jnp.einsum("bhqk,bhkd->bhqd", p, vv).transpose(0, 2, 1, 3).reshape(B, S, D)
    att = lin(att, params["wo"], params["bo"])
    return jax.nn.sigmoid(lin(att, params["fc_w"], params["fc_b"]))


if __name__ == "__main__":
    # Small, module-consistent config.
    B = 2
    a_dim, t_dim = 32, 48
    v_img_size, v_patch_size = 16, 8
    heads, patch_out_d, coa_d, out_d, img_num = 4, 32, 64, 8, 2

    key = jax.random.PRNGKey(0)
    kp, ka, kv, kt = jax.random.split(key, 4)
    params = init_params(kp, a_dim, t_dim, v_patch_size, heads, patch_out_d, coa_d, out_d)

    a = jax.random.normal(ka, (B, a_dim), jnp.float32)
    v = jax.random.normal(kv, (B, img_num, 3, v_img_size, v_img_size), jnp.float32)
    t = jax.random.normal(kt, (B, t_dim), jnp.float32)

    fwd = jax.jit(functools.partial(personality_forward_pallas,
                                    heads=heads, patch_size=v_patch_size))
    out = jax.block_until_ready(fwd(params, a, v, t))

    ref = personality_forward_ref(params, a, v, t, heads=heads, patch_size=v_patch_size)
    assert out.shape == (B, 3, out_d), out.shape
    assert bool(jnp.all(jnp.isfinite(out)))
    assert bool(jnp.allclose(out, ref, atol=5e-3, rtol=5e-3)), "mismatch vs reference"
    print("KERNEL_OK")
</pallas_src>

<mosaic_0001>
module attributes {stable_mosaic.version = 11 : i64} {
  func.func @_fused_forward_kernel(%arg0: i32, %arg1: memref<2x80xf32, #tpu.memory_space<vmem>>, %arg2: memref<80x128xf32, #tpu.memory_space<vmem>>, %arg3: memref<1x128xf32, #tpu.memory_space<vmem>>, %arg4: memref<16x192xf32, #tpu.memory_space<vmem>>, %arg5: memref<2x16xf32, #tpu.memory_space<vmem>>, %arg6: memref<192x32xf32, #tpu.memory_space<vmem>>, %arg7: memref<1x32xf32, #tpu.memory_space<vmem>>, %arg8: memref<32x64xf32, #tpu.memory_space<vmem>>, %arg9: memref<1x64xf32, #tpu.memory_space<vmem>>, %arg10: memref<64x192xf32, #tpu.memory_space<vmem>>, %arg11: memref<1x192xf32, #tpu.memory_space<vmem>>, %arg12: memref<6x6xf32, #tpu.memory_space<vmem>>, %arg13: memref<64x128xf32, #tpu.memory_space<vmem>>, %arg14: memref<1x128xf32, #tpu.memory_space<vmem>>, %arg15: memref<6x128xf32, #tpu.memory_space<vmem>>, %arg16: memref<6x64xf32, #tpu.memory_space<vmem>>, %arg17: memref<6x64xf32, #tpu.memory_space<vmem>>) attributes {dimension_semantics = [#tpu.dimension_semantics<arbitrary>], iteration_bounds = array<i64: 1>, scalar_prefetch = 0 : i64, scratch_operands = 2 : i64, tpu.core_type = #tpu.core_type<tc>, window_params = [{pipeline_mode = #tpu.pipeline_mode<synchronous>, transform_indices = @transform_0, window_bounds = array<i64: 2, 80>}, {pipeline_mode = #tpu.pipeline_mode<synchronous>, transform_indices = @transform_1, window_bounds = array<i64: 80, 128>}, {pipeline_mode = #tpu.pipeline_mode<synchronous>, transform_indices = @transform_2, window_bounds = array<i64: 1, 128>}, {pipeline_mode = #tpu.pipeline_mode<synchronous>, transform_indices = @transform_3, window_bounds = array<i64: 16, 192>}, {pipeline_mode = #tpu.pipeline_mode<synchronous>, transform_indices = @transform_4, window_bounds = array<i64: 2, 16>}, {pipeline_mode = #tpu.pipeline_mode<synchronous>, transform_indices = @transform_5, window_bounds = array<i64: 192, 32>}, {pipeline_mode = #tpu.pipeline_mode<synchronous>, transform_indices = @transform_6, window_bounds = array<i64: 1, 32>}, {pipeline_mode = #tpu.pipeline_mode<synchronous>, transform_indices = @transform_7, window_bounds = array<i64: 32, 64>}, {pipeline_mode = #tpu.pipeline_mode<synchronous>, transform_indices = @transform_8, window_bounds = array<i64: 1, 64>}, {pipeline_mode = #tpu.pipeline_mode<synchronous>, transform_indices = @transform_9, window_bounds = array<i64: 64, 192>}, {pipeline_mode = #tpu.pipeline_mode<synchronous>, transform_indices = @transform_10, window_bounds = array<i64: 1, 192>}, {pipeline_mode = #tpu.pipeline_mode<synchronous>, transform_indices = @transform_11, window_bounds = array<i64: 6, 6>}, {pipeline_mode = #tpu.pipeline_mode<synchronous>, transform_indices = @transform_12, window_bounds = array<i64: 64, 128>}, {pipeline_mode = #tpu.pipeline_mode<synchronous>, transform_indices = @transform_13, window_bounds = array<i64: 1, 128>}, {pipeline_mode = #tpu.pipeline_mode<synchronous>, transform_indices = @transform_14, window_bounds = array<i64: 6, 128>}]} {
    %c0 = arith.constant 0 : index
    %c0_0 = arith.constant 0 : index
    %0 = vector.load %arg1[%c0, %c0_0] : memref<2x80xf32, #tpu.memory_space<vmem>>, vector<2x80xf32>
    %c0_1 = arith.constant 0 : index
    %c0_2 = arith.constant 0 : index
    %1 = vector.load %arg2[%c0_1, %c0_2] : memref<80x128xf32, #tpu.memory_space<vmem>>, vector<80x128xf32>
    %cst = arith.constant dense<0.000000e+00> : vector<2x128xf32>
    %2 = tpu.matmul %0, %1, %cst {dimension_numbers = #tpu.dot_dimension_numbers<[1], [0], [0], [1], [0, 0, 1, 1], [], []>} : vector<2x80xf32>, vector<80x128xf32>, vector<2x128xf32> -> vector<2x128xf32>
    %c0_3 = arith.constant 0 : index
    %c0_4 = arith.constant 0 : index
    %3 = vector.load %arg3[%c0_3, %c0_4] : memref<1x128xf32, #tpu.memory_space<vmem>>, vector<1x128xf32>
    %4 = vector.broadcast %3 : vector<1x128xf32> to vector<2x128xf32>
    %5 = arith.addf %2, %4 : vector<2x128xf32>
    %6 = arith.mulf %5, %5 : vector<2x128xf32>
    %7 = arith.mulf %5, %6 : vector<2x128xf32>
    %cst_5 = arith.constant 4.471500e-02 : f32
    %8 = vector.broadcast %cst_5 : f32 to vector<2x128xf32>
    %9 = arith.mulf %8, %7 : vector<2x128xf32>
    %10 = arith.addf %5, %9 : vector<2x128xf32>
    %cst_6 = arith.constant 0.797884583 : f32
    %11 = vector.broadcast %cst_6 : f32 to vector<2x128xf32>
    %12 = arith.mulf %11, %10 : vector<2x128xf32>
    %13 = math.tanh %12 : vector<2x128xf32>
    %cst_7 = arith.constant 1.000000e+00 : f32
    %14 = vector.broadcast %cst_7 : f32 to vector<2x128xf32>
    %15 = arith.addf %14, %13 : vector<2x128xf32>
    %cst_8 = arith.constant 5.000000e-01 : f32
    %16 = vector.broadcast %cst_8 : f32 to vector<2x128xf32>
    %17 = arith.mulf %16, %15 : vector<2x128xf32>
    %18 = arith.mulf %5, %17 : vector<2x128xf32>
    %c0_9 = arith.constant 0 : index
    %c0_10 = arith.constant 0 : index
    %19 = vector.load %arg5[%c0_9, %c0_10] : memref<2x16xf32, #tpu.memory_space<vmem>>, vector<2x16xf32>
    %c0_11 = arith.constant 0 : index
    %c0_12 = arith.constant 0 : index
    %20 = vector.load %arg4[%c0_11, %c0_12] : memref<16x192xf32, #tpu.memory_space<vmem>>, vector<16x192xf32>
    %cst_13 = arith.constant dense<0.000000e+00> : vector<2x192xf32>
    %21 = tpu.matmul %19, %20, %cst_13 {dimension_numbers = #tpu.dot_dimension_numbers<[1], [0], [0], [1], [0, 0, 1, 1], [], []>} : vector<2x16xf32>, vector<16x192xf32>, vector<2x192xf32> -> vector<2x192xf32>
    %c0_14 = arith.constant 0 : index
    %c0_15 = arith.constant 0 : index
    %22 = vector.load %arg6[%c0_14, %c0_15] : memref<192x32xf32, #tpu.memory_space<vmem>>, vector<192x32xf32>
    %cst_16 = arith.constant dense<0.000000e+00> : vector<2x32xf32>
    %23 = tpu.matmul %21, %22, %cst_16 {dimension_numbers = #tpu.dot_dimension_numbers<[1], [0], [0], [1], [0, 0, 1, 1], [], []>} : vector<2x192xf32>, vector<192x32xf32>, vector<2x32xf32> -> vector<2x32xf32>
    %c0_17 = arith.constant 0 : index
    %c0_18 = arith.constant 0 : index
    %24 = vector.load %arg7[%c0_17, %c0_18] : memref<1x32xf32, #tpu.memory_space<vmem>>, vector<1x32xf32>
    %25 = vector.broadcast %24 : vector<1x32xf32> to vector<2x32xf32>
    %26 = arith.addf %23, %25 : vector<2x32xf32>
    %c0_19 = arith.constant 0 : index
    %c0_20 = arith.constant 0 : index
    %27 = vector.load %arg8[%c0_19, %c0_20] : memref<32x64xf32, #tpu.memory_space<vmem>>, vector<32x64xf32>
    %cst_21 = arith.constant dense<0.000000e+00> : vector<2x64xf32>
    %28 = tpu.matmul %26, %27, %cst_21 {dimension_numbers = #tpu.dot_dimension_numbers<[1], [0], [0], [1], [0, 0, 1, 1], [], []>} : vector<2x32xf32>, vector<32x64xf32>, vector<2x64xf32> -> vector<2x64xf32>
    %c0_22 = arith.constant 0 : index
    %c0_23 = arith.constant 0 : index
    %29 = vector.load %arg9[%c0_22, %c0_23] : memref<1x64xf32, #tpu.memory_space<vmem>>, vector<1x64xf32>
    %30 = vector.broadcast %29 : vector<1x64xf32> to vector<2x64xf32>
    %31 = arith.addf %28, %30 : vector<2x64xf32>
    %32 = arith.mulf %31, %31 : vector<2x64xf32>
    %33 = arith.mulf %31, %32 : vector<2x64xf32>
    %cst_24 = arith.constant 4.471500e-02 : f32
    %34 = vector.broadcast %cst_24 : f32 to vector<2x64xf32>
    %35 = arith.mulf %34, %33 : vector<2x64xf32>
    %36 = arith.addf %31, %35 : vector<2x64xf32>
    %cst_25 = arith.constant 0.797884583 : f32
    %37 = vector.broadcast %cst_25 : f32 to vector<2x64xf32>
    %38 = arith.mulf %37, %36 : vector<2x64xf32>
    %39 = math.tanh %38 : vector<2x64xf32>
    %cst_26 = arith.constant 1.000000e+00 : f32
    %40 = vector.broadcast %cst_26 : f32 to vector<2x64xf32>
    %41 = arith.addf %40, %39 : vector<2x64xf32>
    %cst_27 = arith.constant 5.000000e-01 : f32
    %42 = vector.broadcast %cst_27 : f32 to vector<2x64xf32>
    %43 = arith.mulf %42, %41 : vector<2x64xf32>
    %44 = arith.mulf %31, %43 : vector<2x64xf32>
    %45 = vector.extract_strided_slice %18 {offsets = [0, 0], sizes = [2, 64], strides = [1, 1]} : vector<2x128xf32> to vector<2x64xf32>
    %c0_28 = arith.constant 0 : index
    %c0_29 = arith.constant 0 : index
    %46 = vector.load %arg16[%c0_28, %c0_29] : memref<6x64xf32, #tpu.memory_space<vmem>>, vector<2x64xf32>
    tpu.vector_store %arg16[%c0_28, %c0_29], %45 {strides = array<i32>} : memref<6x64xf32, #tpu.memory_space<vmem>>, vector<2x64xf32>,
    %c2 = arith.constant 2 : index
    %c0_30 = arith.constant 0 : index
    %47 = vector.load %arg16[%c2, %c0_30] : memref<6x64xf32, #tpu.memory_space<vmem>>, vector<2x64xf32>
    tpu.vector_store %arg16[%c2, %c0_30], %44 {strides = array<i32>} : memref<6x64xf32, #tpu.memory_space<vmem>>, vector<2x64xf32>,
    %48 = vector.extract_strided_slice %18 {offsets = [0, 64], sizes = [2, 64], strides = [1, 1]} : vector<2x128xf32> to vector<2x64xf32>
    %c4 = arith.constant 4 : index
    %c0_31 = arith.constant 0 : index
    %49 = vector.load %arg16[%c4, %c0_31] : memref<6x64xf32, #tpu.memory_space<vmem>>, vector<2x64xf32>
    tpu.vector_store %arg16[%c4, %c0_31], %48 {strides = array<i32>} : memref<6x64xf32, #tpu.memory_space<vmem>>, vector<2x64xf32>,
    %c0_32 = arith.constant 0 : index
    %c0_33 = arith.constant 0 : index
    %50 = vector.load %arg16[%c0_32, %c0_33] : memref<6x64xf32, #tpu.memory_space<vmem>>, vector<6x64xf32>
    %c0_34 = arith.constant 0 : index
    %c0_35 = arith.constant 0 : index
    %51 = vector.load %arg10[%c0_34, %c0_35] : memref<64x192xf32, #tpu.memory_space<vmem>>, vector<64x192xf32>
    %cst_36 = arith.constant dense<0.000000e+00> : vector<6x192xf32>
    %52 = tpu.matmul %50, %51, %cst_36 {dimension_numbers = #tpu.dot_dimension_numbers<[1], [0], [0], [1], [0, 0, 1, 1], [], []>} : vector<6x64xf32>, vector<64x192xf32>, vector<6x192xf32> -> vector<6x192xf32>
    %c0_37 = arith.constant 0 : index
    %c0_38 = arith.constant 0 : index
    %53 = vector.load %arg11[%c0_37, %c0_38] : memref<1x192xf32, #tpu.memory_space<vmem>>, vector<1x192xf32>
    %54 = vector.broadcast %53 : vector<1x192xf32> to vector<6x192xf32>
    %55 = arith.addf %52, %54 : vector<6x192xf32>
    %c0_39 = arith.constant 0 : index
    %c0_40 = arith.constant 0 : index
    %56 = vector.load %arg12[%c0_39, %c0_40] : memref<6x6xf32, #tpu.memory_space<vmem>>, vector<6x6xf32>
    %57 = vector.extract_strided_slice %55 {offsets = [0, 0], sizes = [6, 16], strides = [1, 1]} : vector<6x192xf32> to vector<6x16xf32>
    %58 = vector.extract_strided_slice %55 {offsets = [0, 64], sizes = [6, 16], strides = [1, 1]} : vector<6x192xf32> to vector<6x16xf32>
    %59 = vector.extract_strided_slice %55 {offsets = [0, 128], sizes = [6, 16], strides = [1, 1]} : vector<6x192xf32> to vector<6x16xf32>
    %cst_41 = arith.constant dense<0.000000e+00> : vector<6x6xf32>
    %60 = tpu.matmul %57, %58, %cst_41 {dimension_numbers = #tpu.dot_dimension_numbers<[1], [1], [0], [0], [0, 0, 1, 0], [], []>} : vector<6x16xf32>, vector<6x16xf32>, vector<6x6xf32> -> vector<6x6xf32>
    %cst_42 = arith.constant 2.500000e-01 : f32
    %61 = vector.broadcast %cst_42 : f32 to vector<6x6xf32>
    %62 = arith.mulf %60, %61 : vector<6x6xf32>
    %63 = arith.addf %62, %56 : vector<6x6xf32>
    %cst_43 = arith.constant dense<0xFF800000> : vector<6xf32>
    %64 = vector.multi_reduction <maximumf>, %63, %cst_43 [1] : vector<6x6xf32> to vector<6xf32>
    %65 = vector.shape_cast %64 : vector<6xf32> to vector<6x1xf32>
    %66 = vector.broadcast %65 : vector<6x1xf32> to vector<6x6xf32>
    %67 = arith.subf %63, %66 : vector<6x6xf32>
    %68 = math.exp %67 : vector<6x6xf32>
    %cst_44 = arith.constant dense<0.000000e+00> : vector<6xf32>
    %69 = vector.multi_reduction <add>, %68, %cst_44 [1] : vector<6x6xf32> to vector<6xf32>
    %70 = vector.shape_cast %69 : vector<6xf32> to vector<6x1xf32>
    %71 = tpu.reciprocal %70 {approx = true} : vector<6x1xf32> -> vector<6x1xf32>
    %72 = vector.broadcast %71 : vector<6x1xf32> to vector<6x6xf32>
    %73 = arith.mulf %68, %72 : vector<6x6xf32>
    %cst_45 = arith.constant dense<0.000000e+00> : vector<6x16xf32>
    %74 = tpu.matmul %73, %59, %cst_45 {dimension_numbers = #tpu.dot_dimension_numbers<[1], [0], [0], [1], [0, 0, 1, 1], [], []>} : vector<6x6xf32>, vector<6x16xf32>, vector<6x16xf32> -> vector<6x16xf32>
    %c0_46 = arith.constant 0 : index
    %c0_47 = arith.constant 0 : index
    %75 = vector.load %arg17[%c0_46, %c0_47] : memref<6x64xf32, #tpu.memory_space<vmem>>, vector<6x16xf32>
    tpu.vector_store %arg17[%c0_46, %c0_47], %74 {strides = array<i32>} : memref<6x64xf32, #tpu.memory_space<vmem>>, vector<6x16xf32>,
    %76 = vector.extract_strided_slice %55 {offsets = [0, 16], sizes = [6, 16], strides = [1, 1]} : vector<6x192xf32> to vector<6x16xf32>
    %77 = vector.extract_strided_slice %55 {offsets = [0, 80], sizes = [6, 16], strides = [1, 1]} : vector<6x192xf32> to vector<6x16xf32>
    %78 = vector.extract_strided_slice %55 {offsets = [0, 144], sizes = [6, 16], strides = [1, 1]} : vector<6x192xf32> to vector<6x16xf32>
    %cst_48 = arith.constant dense<0.000000e+00> : vector<6x6xf32>
    %79 = tpu.matmul %76, %77, %cst_48 {dimension_numbers = #tpu.dot_dimension_numbers<[1], [1], [0], [0], [0, 0, 1, 0], [], []>} : vector<6x16xf32>, vector<6x16xf32>, vector<6x6xf32> -> vector<6x6xf32>
    %cst_49 = arith.constant 2.500000e-01 : f32
    %80 = vector.broadcast %cst_49 : f32 to vector<6x6xf32>
    %81 = arith.mulf %79, %80 : vector<6x6xf32>
    %82 = arith.addf %81, %56 : vector<6x6xf32>
    %cst_50 = arith.constant dense<0xFF800000> : vector<6xf32>
    %83 = vector.multi_reduction <maximumf>, %82, %cst_50 [1] : vector<6x6xf32> to vector<6xf32>
    %84 = vector.shape_cast %83 : vector<6xf32> to vector<6x1xf32>
    %85 = vector.broadcast %84 : vector<6x1xf32> to vector<6x6xf32>
    %86 = arith.subf %82, %85 : vector<6x6xf32>
    %87 = math.exp %86 : vector<6x6xf32>
    %cst_51 = arith.constant dense<0.000000e+00> : vector<6xf32>
    %88 = vector.multi_reduction <add>, %87, %cst_51 [1] : vector<6x6xf32> to vector<6xf32>
    %89 = vector.shape_cast %88 : vector<6xf32> to vector<6x1xf32>
    %90 = tpu.reciprocal %89 {approx = true} : vector<6x1xf32> -> vector<6x1xf32>
    %91 = vector.broadcast %90 : vector<6x1xf32> to vector<6x6xf32>
    %92 = arith.mulf %87, %91 : vector<6x6xf32>
    %cst_52 = arith.constant dense<0.000000e+00> : vector<6x16xf32>
    %93 = tpu.matmul %92, %78, %cst_52 {dimension_numbers = #tpu.dot_dimension_numbers<[1], [0], [0], [1], [0, 0, 1, 1], [], []>} : vector<6x6xf32>, vector<6x16xf32>, vector<6x16xf32> -> vector<6x16xf32>
    %c0_53 = arith.constant 0 : index
    %c16 = arith.constant 16 : index
    %94 = vector.load %arg17[%c0_53, %c16] : memref<6x64xf32, #tpu.memory_space<vmem>>, vector<6x16xf32>
    tpu.vector_store %arg17[%c0_53, %c16], %93 {strides = array<i32>} : memref<6x64xf32, #tpu.memory_space<vmem>>, vector<6x16xf32>,
    %95 = vector.extract_strided_slice %55 {offsets = [0, 32], sizes = [6, 16], strides = [1, 1]} : vector<6x192xf32> to vector<6x16xf32>
    %96 = vector.extract_strided_slice %55 {offsets = [0, 96], sizes = [6, 16], strides = [1, 1]} : vector<6x192xf32> to vector<6x16xf32>
    %97 = vector.extract_strided_slice %55 {offsets = [0, 160], sizes = [6, 16], strides = [1, 1]} : vector<6x192xf32> to vector<6x16xf32>
    %cst_54 = arith.constant dense<0.000000e+00> : vector<6x6xf32>
    %98 = tpu.matmul %95, %96, %cst_54 {dimension_numbers = #tpu.dot_dimension_numbers<[1], [1], [0], [0], [0, 0, 1, 0], [], []>} : vector<6x16xf32>, vector<6x16xf32>, vector<6x6xf32> -> vector<6x6xf32>
    %cst_55 = arith.constant 2.500000e-01 : f32
    %99 = vector.broadcast %cst_55 : f32 to vector<6x6xf32>
    %100 = arith.mulf %98, %99 : vector<6x6xf32>
    %101 = arith.addf %100, %56 : vector<6x6xf32>
    %cst_56 = arith.constant dense<0xFF800000> : vector<6xf32>
    %102 = vector.multi_reduction <maximumf>, %101, %cst_56 [1] : vector<6x6xf32> to vector<6xf32>
    %103 = vector.shape_cast %102 : vector<6xf32> to vector<6x1xf32>
    %104 = vector.broadcast %103 : vector<6x1xf32> to vector<6x6xf32>
    %105 = arith.subf %101, %104 : vector<6x6xf32>
    %106 = math.exp %105 : vector<6x6xf32>
    %cst_57 = arith.constant dense<0.000000e+00> : vector<6xf32>
    %107 = vector.multi_reduction <add>, %106, %cst_57 [1] : vector<6x6xf32> to vector<6xf32>
    %108 = vector.shape_cast %107 : vector<6xf32> to vector<6x1xf32>
    %109 = tpu.reciprocal %108 {approx = true} : vector<6x1xf32> -> vector<6x1xf32>
    %110 = vector.broadcast %109 : vector<6x1xf32> to vector<6x6xf32>
    %111 = arith.mulf %106, %110 : vector<6x6xf32>
    %cst_58 = arith.constant dense<0.000000e+00> : vector<6x16xf32>
    %112 = tpu.matmul %111, %97, %cst_58 {dimension_numbers = #tpu.dot_dimension_numbers<[1], [0], [0], [1], [0, 0, 1, 1], [], []>} : vector<6x6xf32>, vector<6x16xf32>, vector<6x16xf32> -> vector<6x16xf32>
    %c0_59 = arith.constant 0 : index
    %c32 = arith.constant 32 : index
    %113 = vector.load %arg17[%c0_59, %c32] : memref<6x64xf32, #tpu.memory_space<vmem>>, vector<6x16xf32>
    tpu.vector_store %arg17[%c0_59, %c32], %112 {strides = array<i32>} : memref<6x64xf32, #tpu.memory_space<vmem>>, vector<6x16xf32>,
    %114 = vector.extract_strided_slice %55 {offsets = [0, 48], sizes = [6, 16], strides = [1, 1]} : vector<6x192xf32> to vector<6x16xf32>
    %115 = vector.extract_strided_slice %55 {offsets = [0, 112], sizes = [6, 16], strides = [1, 1]} : vector<6x192xf32> to vector<6x16xf32>
    %116 = vector.extract_strided_slice %55 {offsets = [0, 176], sizes = [6, 16], strides = [1, 1]} : vector<6x192xf32> to vector<6x16xf32>
    %cst_60 = arith.constant dense<0.000000e+00> : vector<6x6xf32>
    %117 = tpu.matmul %114, %115, %cst_60 {dimension_numbers = #tpu.dot_dimension_numbers<[1], [1], [0], [0], [0, 0, 1, 0], [], []>} : vector<6x16xf32>, vector<6x16xf32>, vector<6x6xf32> -> vector<6x6xf32>
    %cst_61 = arith.constant 2.500000e-01 : f32
    %118 = vector.broadcast %cst_61 : f32 to vector<6x6xf32>
    %119 = arith.mulf %117, %118 : vector<6x6xf32>
    %120 = arith.addf %119, %56 : vector<6x6xf32>
    %cst_62 = arith.constant dense<0xFF800000> : vector<6xf32>
    %121 = vector.multi_reduction <maximumf>, %120, %cst_62 [1] : vector<6x6xf32> to vector<6xf32>
    %122 = vector.shape_cast %121 : vector<6xf32> to vector<6x1xf32>
    %123 = vector.broadcast %122 : vector<6x1xf32> to vector<6x6xf32>
    %124 = arith.subf %120, %123 : vector<6x6xf32>
    %125 = math.exp %124 : vector<6x6xf32>
    %cst_63 = arith.constant dense<0.000000e+00> : vector<6xf32>
    %126 = vector.multi_reduction <add>, %125, %cst_63 [1] : vector<6x6xf32> to vector<6xf32>
    %127 = vector.shape_cast %126 : vector<6xf32> to vector<6x1xf32>
    %128 = tpu.reciprocal %127 {approx = true} : vector<6x1xf32> -> vector<6x1xf32>
    %129 = vector.broadcast %128 : vector<6x1xf32> to vector<6x6xf32>
    %130 = arith.mulf %125, %129 : vector<6x6xf32>
    %cst_64 = arith.constant dense<0.000000e+00> : vector<6x16xf32>
    %131 = tpu.matmul %130, %116, %cst_64 {dimension_numbers = #tpu.dot_dimension_numbers<[1], [0], [0], [1], [0, 0, 1, 1], [], []>} : vector<6x6xf32>, vector<6x16xf32>, vector<6x16xf32> -> vector<6x16xf32>
    %c0_65 = arith.constant 0 : index
    %c48 = arith.constant 48 : index
    %132 = vector.load %arg17[%c0_65, %c48] : memref<6x64xf32, #tpu.memory_space<vmem>>, vector<6x16xf32>
    tpu.vector_store %arg17[%c0_65, %c48], %131 {strides = array<i32>} : memref<6x64xf32, #tpu.memory_space<vmem>>, vector<6x16xf32>,
    %c0_66 = arith.constant 0 : index
    %c0_67 = arith.constant 0 : index
    %133 = vector.load %arg17[%c0_66, %c0_67] : memref<6x64xf32, #tpu.memory_space<vmem>>, vector<6x64xf32>
    %c0_68 = arith.constant 0 : index
    %c0_69 = arith.constant 0 : index
    %134 = vector.load %arg13[%c0_68, %c0_69] : memref<64x128xf32, #tpu.memory_space<vmem>>, vector<64x128xf32>
    %cst_70 = arith.constant dense<0.000000e+00> : vector<6x128xf32>
    %135 = tpu.matmul %133, %134, %cst_70 {dimension_numbers = #tpu.dot_dimension_numbers<[1], [0], [0], [1], [0, 0, 1, 1], [], []>} : vector<6x64xf32>, vector<64x128xf32>, vector<6x128xf32> -> vector<6x128xf32>
    %c0_71 = arith.constant 0 : index
    %c0_72 = arith.constant 0 : index
    %136 = vector.load %arg14[%c0_71, %c0_72] : memref<1x128xf32, #tpu.memory_space<vmem>>, vector<1x128xf32>
    %137 = vector.broadcast %136 : vector<1x128xf32> to vector<6x128xf32>
    %138 = arith.addf %135, %137 : vector<6x128xf32>
    %139 = arith.negf %138 : vector<6x128xf32>
    %140 = math.exp %139 : vector<6x128xf32>
    %cst_73 = arith.constant 1.000000e+00 : f32
    %141 = vector.broadcast %cst_73 : f32 to vector<6x128xf32>
    %142 = arith.addf %141, %140 : vector<6x128xf32>
    %143 = arith.divf %141, %142 : vector<6x128xf32>
    %c0_74 = arith.constant 0 : index
    %c0_75 = arith.constant 0 : index
    %144 = vector.load %arg15[%c0_74, %c0_75] : memref<6x128xf32, #tpu.memory_space<vmem>>, vector<6x128xf32>
    tpu.vector_store %arg15[%c0_74, %c0_75], %143 {strides = array<i32>} : memref<6x128xf32, #tpu.memory_space<vmem>>, vector<6x128xf32>,
    return
  }
  func.func @transform_0(%arg0: i32) -> (i32, i32) {
    %c0_i32 = arith.constant 0 : i32
    %c0_i32_0 = arith.constant 0 : i32
    %c0_i32_1 = arith.constant 0 : i32
    return %c0_i32, %c0_i32_0 : i32, i32
  }
  func.func @transform_1(%arg0: i32) -> (i32, i32) {
    %c0_i32 = arith.constant 0 : i32
    %c0_i32_0 = arith.constant 0 : i32
    %c0_i32_1 = arith.constant 0 : i32
    return %c0_i32, %c0_i32_0 : i32, i32
  }
  func.func @transform_2(%arg0: i32) -> (i32, i32) {
    %c0_i32 = arith.constant 0 : i32
    %c0_i32_0 = arith.constant 0 : i32
    %c0_i32_1 = arith.constant 0 : i32
    return %c0_i32, %c0_i32_0 : i32, i32
  }
  func.func @transform_3(%arg0: i32) -> (i32, i32) {
    %c0_i32 = arith.constant 0 : i32
    %c0_i32_0 = arith.constant 0 : i32
    %c0_i32_1 = arith.constant 0 : i32
    return %c0_i32, %c0_i32_0 : i32, i32
  }
  func.func @transform_4(%arg0: i32) -> (i32, i32) {
    %c0_i32 = arith.constant 0 : i32
    %c0_i32_0 = arith.constant 0 : i32
    %c0_i32_1 = arith.constant 0 : i32
    return %c0_i32, %c0_i32_0 : i32, i32
  }
  func.func @transform_5(%arg0: i32) -> (i32, i32) {
    %c0_i32 = arith.constant 0 : i32
    %c0_i32_0 = arith.constant 0 : i32
    %c0_i32_1 = arith.constant 0 : i32
    return %c0_i32, %c0_i32_0 : i32, i32
  }
  func.func @transform_6(%arg0: i32) -> (i32, i32) {
    %c0_i32 = arith.constant 0 : i32
    %c0_i32_0 = arith.constant 0 : i32
    %c0_i32_1 = arith.constant 0 : i32
    return %c0_i32, %c0_i32_0 : i32, i32
  }
  func.func @transform_7(%arg0: i32) -> (i32, i32) {
    %c0_i32 = arith.constant 0 : i32
    %c0_i32_0 = arith.constant 0 : i32
    %c0_i32_1 = arith.constant 0 : i32
    return %c0_i32, %c0_i32_0 : i32, i32
  }
  func.func @transform_8(%arg0: i32) -> (i32, i32) {
    %c0_i32 = arith.constant 0 : i32
    %c0_i32_0 = arith.constant 0 : i32
    %c0_i32_1 = arith.constant 0 : i32
    return %c0_i32, %c0_i32_0 : i32, i32
  }
  func.func @transform_9(%arg0: i32) -> (i32, i32) {
    %c0_i32 = arith.constant 0 : i32
    %c0_i32_0 = arith.constant 0 : i32
    %c0_i32_1 = arith.constant 0 : i32
    return %c0_i32, %c0_i32_0 : i32, i32
  }
  func.func @transform_10(%arg0: i32) -> (i32, i32) {
    %c0_i32 = arith.constant 0 : i32
    %c0_i32_0 = arith.constant 0 : i32
    %c0_i32_1 = arith.constant 0 : i32
    return %c0_i32, %c0_i32_0 : i32, i32
  }
  func.func @transform_11(%arg0: i32) -> (i32, i32) {
    %c0_i32 = arith.constant 0 : i32
    %c0_i32_0 = arith.constant 0 : i32
    %c0_i32_1 = arith.constant 0 : i32
    return %c0_i32, %c0_i32_0 : i32, i32
  }
  func.func @transform_12(%arg0: i32) -> (i32, i32) {
    %c0_i32 = arith.constant 0 : i32
    %c0_i32_0 = arith.constant 0 : i32
    %c0_i32_1 = arith.constant 0 : i32
    return %c0_i32, %c0_i32_0 : i32, i32
  }
  func.func @transform_13(%arg0: i32) -> (i32, i32) {
    %c0_i32 = arith.constant 0 : i32
    %c0_i32_0 = arith.constant 0 : i32
    %c0_i32_1 = arith.constant 0 : i32
    return %c0_i32, %c0_i32_0 : i32, i32
  }
  func.func @transform_14(%arg0: i32) -> (i32, i32) {
    %c0_i32 = arith.constant 0 : i32
    %c0_i32_0 = arith.constant 0 : i32
    %c0_i32_1 = arith.constant 0 : i32
    return %c0_i32, %c0_i32_0 : i32, i32
  }
}

</mosaic_0001>

<llo_original>
// kernel: personality_forward_pallas.1
$region0: #{personality_forward_pallas.1}
  #allocation0 [shape = 'u32[]', space=smem, size = 0x4, offset = 0x4, fixed_abs, tag = 'smem constant byte address 0x4 - core index']
  #allocation1 [shape = 'u32[144,128]{1,0:T(1,128)}', space=vmem, size = 0x12000, scoped, tag = 'internal scratch']
  #allocation2 [shape = 'f32[6,64]{1,0:T(8,128)}', space=vmem, size = 0x1000, scoped, tag = 'scratch operand']
  #allocation3 [shape = 'f32[6,64]{1,0:T(8,128)}', space=vmem, size = 0x1000, scoped, tag = 'scratch operand']
  %s0 = inlined_call_operand.vmem [shape: f32[2,80], index: 0, kind: input, shape index: {}]
  %s1 = inlined_call_operand.vmem [shape: f32[80,128], index: 1, kind: input, shape index: {}]
  %s2 = inlined_call_operand.vmem [shape: f32[1,128], index: 2, kind: input, shape index: {}]
  %s3 = inlined_call_operand.vmem [shape: f32[16,192], index: 3, kind: input, shape index: {}]
  %s4 = inlined_call_operand.vmem [shape: f32[2,16], index: 4, kind: input, shape index: {}]
  %s5 = inlined_call_operand.vmem [shape: f32[192,32], index: 5, kind: input, shape index: {}]
  %s6 = inlined_call_operand.vmem [shape: f32[1,32], index: 6, kind: input, shape index: {}]
  %s7 = inlined_call_operand.vmem [shape: f32[32,64], index: 7, kind: input, shape index: {}]
  %s8 = inlined_call_operand.vmem [shape: f32[1,64], index: 8, kind: input, shape index: {}]
  %s9 = inlined_call_operand.vmem [shape: f32[64,192], index: 9, kind: input, shape index: {}]
  %s10 = inlined_call_operand.vmem [shape: f32[1,192], index: 10, kind: input, shape index: {}]
  %s11 = inlined_call_operand.vmem [shape: f32[6,6], index: 11, kind: input, shape index: {}]
  %s12 = inlined_call_operand.vmem [shape: f32[64,128], index: 12, kind: input, shape index: {}]
  %s13 = inlined_call_operand.vmem [shape: f32[1,128], index: 13, kind: input, shape index: {}]
  %s14 = inlined_call_operand.vmem [shape: f32[6,128], index: 14, kind: output, shape index: {}]
  %s15 = sld [smem:[#allocation0]]
  $region66: #{personality_forward_pallas.1} parent=0
    _
  %s17 = ssub.s32 1, %s15
  %s18 = scalar_select 0, %s17, %s15
  // Predicated region
  $region2: #{personality_forward_pallas.1} parent=0 // pred_check
    _
  $region3: #{personality_forward_pallas.1} parent=0 // pred_check_branch
    %20 = sbr.rel (0) target = $region5
  $region4: #{personality_forward_pallas.1} parent=0 // pred_region
    _
  $region5: #{personality_forward_pallas.1} parent=0 // pred_fallthru
    _
  // Predicated region
  $region6: #{personality_forward_pallas.1} parent=0 // pred_check
    _
  $region7: #{personality_forward_pallas.1} parent=0 // pred_check_branch
    %22 = sbr.rel (0) target = $region9
  $region8: #{personality_forward_pallas.1} parent=0 // pred_region
    _
  $region9: #{personality_forward_pallas.1} parent=0 // pred_fallthru
    _
  // Predicated region
  $region10: #{personality_forward_pallas.1} parent=0 // pred_check
    _
  $region11: #{personality_forward_pallas.1} parent=0 // pred_check_branch
    %24 = sbr.rel (0) target = $region13
  $region12: #{personality_forward_pallas.1} parent=0 // pred_region
    _
  $region13: #{personality_forward_pallas.1} parent=0 // pred_fallthru
    _
  // Predicated region
  $region14: #{personality_forward_pallas.1} parent=0 // pred_check
    _
  $region15: #{personality_forward_pallas.1} parent=0 // pred_check_branch
    %26 = sbr.rel (0) target = $region17
  $region16: #{personality_forward_pallas.1} parent=0 // pred_region
    _
  $region17: #{personality_forward_pallas.1} parent=0 // pred_fallthru
    _
  // Predicated region
  $region18: #{personality_forward_pallas.1} parent=0 // pred_check
    _
  $region19: #{personality_forward_pallas.1} parent=0 // pred_check_branch
    %28 = sbr.rel (0) target = $region21
  $region20: #{personality_forward_pallas.1} parent=0 // pred_region
    _
  $region21: #{personality_forward_pallas.1} parent=0 // pred_fallthru
    _
  // Predicated region
  $region22: #{personality_forward_pallas.1} parent=0 // pred_check
    _
  $region23: #{personality_forward_pallas.1} parent=0 // pred_check_branch
    %30 = sbr.rel (0) target = $region25
  $region24: #{personality_forward_pallas.1} parent=0 // pred_region
    _
  $region25: #{personality_forward_pallas.1} parent=0 // pred_fallthru
    _
  // Predicated region
  $region26: #{personality_forward_pallas.1} parent=0 // pred_check
    _
  $region27: #{personality_forward_pallas.1} parent=0 // pred_check_branch
    %32 = sbr.rel (0) target = $region29
  $region28: #{personality_forward_pallas.1} parent=0 // pred_region
    _
  $region29: #{personality_forward_pallas.1} parent=0 // pred_fallthru
    _
  // Predicated region
  $region30: #{personality_forward_pallas.1} parent=0 // pred_check
    _
  $region31: #{personality_forward_pallas.1} parent=0 // pred_check_branch
    %34 = sbr.rel (0) target = $region33
  $region32: #{personality_forward_pallas.1} parent=0 // pred_region
    _
  $region33: #{personality_forward_pallas.1} parent=0 // pred_fallthru
    _
  // Predicated region
  $region34: #{personality_forward_pallas.1} parent=0 // pred_check
    _
  $region35: #{personality_forward_pallas.1} parent=0 // pred_check_branch
    %36 = sbr.rel (0) target = $region37
  $region36: #{personality_forward_pallas.1} parent=0 // pred_region
    _
  $region37: #{personality_forward_pallas.1} parent=0 // pred_fallthru
    _
  // Predicated region
  $region38: #{personality_forward_pallas.1} parent=0 // pred_check
    _
  $region39: #{personality_forward_pallas.1} parent=0 // pred_check_branch
    %38 = sbr.rel (0) target = $region41
  $region40: #{personality_forward_pallas.1} parent=0 // pred_region
    _
  $region41: #{personality_forward_pallas.1} parent=0 // pred_fallthru
    _
  // Predicated region
  $region42: #{personality_forward_pallas.1} parent=0 // pred_check
    _
  $region43: #{personality_forward_pallas.1} parent=0 // pred_check_branch
    %40 = sbr.rel (0) target = $region45
  $region44: #{personality_forward_pallas.1} parent=0 // pred_region
    _
  $region45: #{personality_forward_pallas.1} parent=0 // pred_fallthru
    _
  // Predicated region
  $region46: #{personality_forward_pallas.1} parent=0 // pred_check
    _
  $region47: #{personality_forward_pallas.1} parent=0 // pred_check_branch
    %42 = sbr.rel (0) target = $region49
  $region48: #{personality_forward_pallas.1} parent=0 // pred_region
    _
  $region49: #{personality_forward_pallas.1} parent=0 // pred_fallthru
    _
  // Predicated region
  $region50: #{personality_forward_pallas.1} parent=0 // pred_check
    _
  $region51: #{personality_forward_pallas.1} parent=0 // pred_check_branch
    %44 = sbr.rel (0) target = $region53
  $region52: #{personality_forward_pallas.1} parent=0 // pred_region
    _
  $region53: #{personality_forward_pallas.1} parent=0 // pred_fallthru
    _
  // Predicated region
  $region54: #{personality_forward_pallas.1} parent=0 // pred_check
    _
  $region55: #{personality_forward_pallas.1} parent=0 // pred_check_branch
    %46 = sbr.rel (0) target = $region57
  $region56: #{personality_forward_pallas.1} parent=0 // pred_region
    _
  $region57: #{personality_forward_pallas.1} parent=0 // pred_fallthru
    _
  %v47 = vld [vmem:[%s0] sm:$0x3]
  %v48 = vld [vmem:[%s1] sm:$0xff]
  %v49 = vld [vmem:[%s1 + $0x8] sm:$0xff]
  %v50 = vld [vmem:[%s1 + $0x10] sm:$0xff]
  %v51 = vld [vmem:[%s1 + $0x18] sm:$0xff]
  %v52 = vld [vmem:[%s1 + $0x20] sm:$0xff]
  %v53 = vld [vmem:[%s1 + $0x28] sm:$0xff]
  %v54 = vld [vmem:[%s1 + $0x30] sm:$0xff]
  %v55 = vld [vmem:[%s1 + $0x38] sm:$0xff]
  %v56 = vld [vmem:[%s1 + $0x40] sm:$0xff]
  %v57 = vld [vmem:[%s1 + $0x48] sm:$0xff]
  %v58 = vld [vmem:[%s2] sm:$0x1]
  %v60 = vlaneseq
  %v61 = vshrl.u32 %v60, 7
  %v62 = vsub.s32 0, %v61
  %v63 = vrot.slane %v58, %v62
  %vm65 = vcmask 654336
  %v67 = vsel %vm65, %v47, 0
  %69 = vmatprep.subr.mxu0 0.0
  %70 = vmatpush1.msra.mxu0 %v48
  %71 = vmatprep.subr.mxu0 0.0
  %72 = vmatpush1.msra.mxu0 %v49
  %73 = vmatprep.subr.mxu0 0.0
  %74 = vmatpush1.msra.mxu0 %v50
  %75 = vmatprep.subr.mxu0 0.0
  %76 = vmatpush1.msra.mxu0 %v51
  %77 = vmatprep.subr.mxu0 0.0
  %78 = vmatpush1.msra.mxu0 %v52
  %79 = vmatprep.subr.mxu0 0.0
  %80 = vmatpush1.msra.mxu0 %v53
  %81 = vmatprep.subr.mxu0 0.0
  %82 = vmatpush1.msra.mxu0 %v54
  %83 = vmatprep.subr.mxu0 0.0
  %84 = vmatpush1.msra.mxu0 %v55
  %85 = vmatprep.subr.mxu0 0.0
  %86 = vmatpush1.msra.mxu0 %v56
  %87 = vmatprep.subr.mxu0 0.0
  %88 = vmatpush1.msra.mxu0 %v57
  %89 = vmatprep.subr.mxu0 0.0
  %90 = vmatpush1.msra.mxu0 0.0
  %91 = vmatprep.subr.mxu0 0.0
  %92 = vmatpush1.msra.mxu0 0.0
  %93 = vmatprep.subr.mxu0 0.0
  %94 = vmatpush1.msra.mxu0 0.0
  %95 = vmatprep.subr.mxu0 0.0
  %96 = vmatpush1.msra.mxu0 0.0
  %97 = vmatprep.subr.mxu0 0.0
  %98 = vmatpush1.msra.mxu0 0.0
  %99 = vmatprep.subr.mxu0 0.0
  %100 = vmatpush1.msra.mxu0 0.0
  %101 = vmatprep.subr.mxu0 0.0
  %102 = vmatpush1.msra.mxu0 0.0
  %103 = vmatprep.subr.mxu0 0.0
  %104 = vmatpush1.msra.mxu0 0.0
  %105 = vmatprep.subr.mxu0 0.0
  %106 = vmatpush1.msra.mxu0 0.0
  %107 = vmatprep.subr.mxu0 0.0
  %108 = vmatpush1.msra.mxu0 0.0
  %109 = vmatprep.subr.mxu0 0.0
  %110 = vmatpush1.msra.mxu0 0.0
  %111 = vmatprep.subr.mxu0 0.0
  %112 = vmatpush1.msra.mxu0 0.0
  %113 = vmatprep.subr.mxu0 0.0
  %114 = vmatpush1.msra.mxu0 0.0
  %115 = vmatprep.subr.mxu0 0.0
  %116 = vmatpush1.msra.mxu0 0.0
  %117 = vmatprep.subr.mxu0 0.0
  %118 = vmatpush1.msra.mxu0 0.0
  %119 = vmatprep.subr.mxu0 0.0
  %120 = vmatpush1.msra.mxu0 0.0
  %121 = vmatprep.subr.mxu0 0.0
  %122 = vmatpush1.msra.mxu0 0.0
  %123 = vmatprep.subr.mxu0 0.0
  %124 = vmatpush1.msra.mxu0 0.0
  %125 = vmatprep.subr.mxu0 0.0
  %126 = vmatpush1.msra.mxu0 0.0
  %127 = vmatprep.subr.mxu0 0.0
  %128 = vmatpush1.msra.mxu0 0.0
  %129 = vmatprep.subr.mxu0 0.0
  %130 = vmatpush1.msra.mxu0 0.0
  %131 = vmatprep.subr.mxu0 0.0
  %132 = vmatpush1.msra.mxu0 0.0
  %133 = vmatprep.mubr.f32.mxu0 0.0
  %134 = vmatmul.mubr.f32.gmra.mrb[0].mxu0 %v67
  %v135 = vpop.f32.mrb[0].mxu0
  %v136 = vadd.f32 %v63, %v135
  %v137 = vpop.f32.mrb[0].mxu0
  %138 = vdwg.mxu0
  %v139 = vmul.f32 %v136, %v136
  %v140 = vmul.f32 %v136, %v139
  %v141 = vmul.f32 %v140, 0.044715
  %v142 = vadd.f32 %v136, %v141
  %v143 = vmul.f32 %v142, 0.7978846
  %v144 = vtanh.pop %v143
  %v145 = vadd.f32 %v144, 1.0
  %v146 = vmul.f32 %v145, 0.5
  %v147 = vmul.f32 %v136, %v146
  %v148 = vld [vmem:[%s4] sm:$0x3]
  %v149 = vld [vmem:[%s3] sm:$0xff]
  %v150 = vld [vmem:[%s3 + $0x8] sm:$0xff]
  %v151 = vld [vmem:[%s3 + $0x10] sm:$0xff]
  %v152 = vld [vmem:[%s3 + $0x18] sm:$0xff]
  %vm153 = vcmask 130048
  %v155 = vsel %vm153, %v148, 0
  %157 = vmatprep.subr.mxu0 %v150
  %158 = vmatpush1.msra.mxu0 %v149
  %159 = vmatprep.subr.mxu0 %v152
  %160 = vmatpush1.msra.mxu0 %v151
  %161 = vmatprep.subr.mxu0 0.0
  %162 = vmatpush1.msra.mxu0 0.0
  %163 = vmatprep.subr.mxu0 0.0
  %164 = vmatpush1.msra.mxu0 0.0
  %165 = vmatprep.subr.mxu0 0.0
  %166 = vmatpush1.msra.mxu0 0.0
  %167 = vmatprep.subr.mxu0 0.0
  %168 = vmatpush1.msra.mxu0 0.0
  %169 = vmatprep.subr.mxu0 0.0
  %170 = vmatpush1.msra.mxu0 0.0
  %171 = vmatprep.subr.mxu0 0.0
  %172 = vmatpush1.msra.mxu0 0.0
  %173 = vmatprep.subr.mxu0 0.0
  %174 = vmatpush1.msra.mxu0 0.0
  %175 = vmatprep.subr.mxu0 0.0
  %176 = vmatpush1.msra.mxu0 0.0
  %177 = vmatprep.subr.mxu0 0.0
  %178 = vmatpush1.msra.mxu0 0.0
  %179 = vmatprep.subr.mxu0 0.0
  %180 = vmatpush1.msra.mxu0 0.0
  %181 = vmatprep.subr.mxu0 0.0
  %182 = vmatpush1.msra.mxu0 0.0
  %183 = vmatprep.subr.mxu0 0.0
  %184 = vmatpush1.msra.mxu0 0.0
  %185 = vmatprep.subr.mxu0 0.0
  %186 = vmatpush1.msra.mxu0 0.0
  %187 = vmatprep.subr.mxu0 0.0
  %188 = vmatpush1.msra.mxu0 0.0
  %189 = vmatprep.subr.mxu0 0.0
  %190 = vmatpush1.msra.mxu0 0.0
  %191 = vmatprep.subr.mxu0 0.0
  %192 = vmatpush1.msra.mxu0 0.0
  %193 = vmatprep.subr.mxu0 0.0
  %194 = vmatpush1.msra.mxu0 0.0
  %195 = vmatprep.subr.mxu0 0.0
  %196 = vmatpush1.msra.mxu0 0.0
  %197 = vmatprep.subr.mxu0 0.0
  %198 = vmatpush1.msra.mxu0 0.0
  %199 = vmatprep.subr.mxu0 0.0
  %200 = vmatpush1.msra.mxu0 0.0
  %201 = vmatprep.subr.mxu0 0.0
  %202 = vmatpush1.msra.mxu0 0.0
  %203 = vmatprep.subr.mxu0 0.0
  %204 = vmatpush1.msra.mxu0 0.0
  %205 = vmatprep.subr.mxu0 0.0
  %206 = vmatpush1.msra.mxu0 0.0
  %207 = vmatprep.subr.mxu0 0.0
  %208 = vmatpush1.msra.mxu0 0.0
  %209 = vmatprep.subr.mxu0 0.0
  %210 = vmatpush1.msra.mxu0 0.0
  %211 = vmatprep.subr.mxu0 0.0
  %212 = vmatpush1.msra.mxu0 0.0
  %213 = vmatprep.subr.mxu0 0.0
  %214 = vmatpush1.msra.mxu0 0.0
  %215 = vmatprep.subr.mxu0 0.0
  %216 = vmatpush1.msra.mxu0 0.0
  %217 = vmatprep.subr.mxu0 0.0
  %218 = vmatpush1.msra.mxu0 0.0
  %219 = vmatprep.subr.mxu0 0.0
  %220 = vmatpush1.msra.mxu0 0.0
  %221 = vmatprep.mubr.f32.mxu0 0.0
  %222 = vmatmul.mubr.f32.gmra.mrb[0].mxu0 %v155
  %v223 = vpop.f32.mrb[0].mxu0
  %v224 = vadd.f32 0.0, %v223
  %v225 = vpop.f32.mrb[0].mxu0
  %v226 = vadd.f32 0.0, %v225
  %227 = vdwg.mxu0
  %v228 = vld [vmem:[%s5] sm:$0xff]
  %v229 = vld [vmem:[%s5 + $0x8] sm:$0xff]
  %v230 = vld [vmem:[%s5 + $0x10] sm:$0xff]
  %v231 = vld [vmem:[%s5 + $0x18] sm:$0xff]
  %v232 = vld [vmem:[%s5 + $0x20] sm:$0xff]
  %v233 = vld [vmem:[%s5 + $0x28] sm:$0xff]
  %v234 = vld [vmem:[%s5 + $0x30] sm:$0xff]
  %v235 = vld [vmem:[%s5 + $0x38] sm:$0xff]
  %v236 = vld [vmem:[%s5 + $0x40] sm:$0xff]
  %v237 = vld [vmem:[%s5 + $0x48] sm:$0xff]
  %v238 = vld [vmem:[%s5 + $0x50] sm:$0xff]
  %v239 = vld [vmem:[%s5 + $0x58] sm:$0xff]
  %v240 = vld [vmem:[%s5 + $0x60] sm:$0xff]
  %v241 = vld [vmem:[%s5 + $0x68] sm:$0xff]
  %v242 = vld [vmem:[%s5 + $0x70] sm:$0xff]
  %v243 = vld [vmem:[%s5 + $0x78] sm:$0xff]
  %v244 = vld [vmem:[%s5 + $0x80] sm:$0xff]
  %v245 = vld [vmem:[%s5 + $0x88] sm:$0xff]
  %v246 = vld [vmem:[%s5 + $0x90] sm:$0xff]
  %v247 = vld [vmem:[%s5 + $0x98] sm:$0xff]
  %v248 = vld [vmem:[%s5 + $0xa0] sm:$0xff]
  %v249 = vld [vmem:[%s5 + $0xa8] sm:$0xff]
  %v250 = vld [vmem:[%s5 + $0xb0] sm:$0xff]
  %v251 = vld [vmem:[%s5 + $0xb8] sm:$0xff]
  %v252 = vld [vmem:[%s6] sm:$0x1]
  %v254 = vlaneseq
  %v255 = vshrl.u32 %v254, 7
  %v256 = vsub.s32 0, %v255
  %v257 = vrot.slane %v252, %v256
  %vm259 = vcmask 523264
  %v261 = vsel %vm259, %v226, 0
  %263 = vmatprep.subr.mxu0 0.0
  %264 = vmatpush1.msra.mxu0 %v228
  %265 = vmatprep.subr.mxu0 0.0
  %266 = vmatpush1.msra.mxu0 %v229
  %267 = vmatprep.subr.mxu0 0.0
  %268 = vmatpush1.msra.mxu0 %v230
  %269 = vmatprep.subr.mxu0 0.0
  %270 = vmatpush1.msra.mxu0 %v231
  %271 = vmatprep.subr.mxu0 0.0
  %272 = vmatpush1.msra.mxu0 %v232
  %273 = vmatprep.subr.mxu0 0.0
  %274 = vmatpush1.msra.mxu0 %v233
  %275 = vmatprep.subr.mxu0 0.0
  %276 = vmatpush1.msra.mxu0 %v234
  %277 = vmatprep.subr.mxu0 0.0
  %278 = vmatpush1.msra.mxu0 %v235
  %279 = vmatprep.subr.mxu0 0.0
  %280 = vmatpush1.msra.mxu0 %v236
  %281 = vmatprep.subr.mxu0 0.0
  %282 = vmatpush1.msra.mxu0 %v237
  %283 = vmatprep.subr.mxu0 0.0
  %284 = vmatpush1.msra.mxu0 %v238
  %285 = vmatprep.subr.mxu0 0.0
  %286 = vmatpush1.msra.mxu0 %v239
  %287 = vmatprep.subr.mxu0 0.0
  %288 = vmatpush1.msra.mxu0 %v240
  %289 = vmatprep.subr.mxu0 0.0
  %290 = vmatpush1.msra.mxu0 %v241
  %291 = vmatprep.subr.mxu0 0.0
  %292 = vmatpush1.msra.mxu0 %v242
  %293 = vmatprep.subr.mxu0 0.0
  %294 = vmatpush1.msra.mxu0 %v243
  %295 = vmatprep.subr.mxu0 0.0
  %296 = vmatpush1.msra.mxu0 %v244
  %297 = vmatprep.subr.mxu0 0.0
  %298 = vmatpush1.msra.mxu0 %v245
  %299 = vmatprep.subr.mxu0 0.0
  %300 = vmatpush1.msra.mxu0 %v246
  %301 = vmatprep.subr.mxu0 0.0
  %302 = vmatpush1.msra.mxu0 %v247
  %303 = vmatprep.subr.mxu0 0.0
  %304 = vmatpush1.msra.mxu0 %v248
  %305 = vmatprep.subr.mxu0 0.0
  %306 = vmatpush1.msra.mxu0 %v249
  %307 = vmatprep.subr.mxu0 0.0
  %308 = vmatpush1.msra.mxu0 %v250
  %309 = vmatprep.subr.mxu0 0.0
  %310 = vmatpush1.msra.mxu0 %v251
  %311 = vmatprep.subr.mxu0 0.0
  %312 = vmatpush1.msra.mxu0 0.0
  %313 = vmatprep.subr.mxu0 0.0
  %314 = vmatpush1.msra.mxu0 0.0
  %315 = vmatprep.subr.mxu0 0.0
  %316 = vmatpush1.msra.mxu0 0.0
  %317 = vmatprep.subr.mxu0 0.0
  %318 = vmatpush1.msra.mxu0 0.0
  %319 = vmatprep.subr.mxu0 0.0
  %320 = vmatpush1.msra.mxu0 0.0
  %321 = vmatprep.subr.mxu0 0.0
  %322 = vmatpush1.msra.mxu0 0.0
  %323 = vmatprep.subr.mxu0 0.0
  %324 = vmatpush1.msra.mxu0 0.0
  %325 = vmatprep.subr.mxu0 0.0
  %326 = vmatpush1.msra.mxu0 0.0
  %327 = vmatprep.mubr.f32.mxu0 %v261
  %328 = vmatmul.mubr.f32.gmra.mrb[0].mxu0 %v224
  %v329 = vpop.f32.mrb[0].mxu0
  %v330 = vadd.f32 %v257, %v329
  %v331 = vpop.f32.mrb[0].mxu0
  %332 = vdwg.mxu0
  %v333 = vld [vmem:[%s7] sm:$0xff]
  %v334 = vld [vmem:[%s7 + $0x8] sm:$0xff]
  %v335 = vld [vmem:[%s7 + $0x10] sm:$0xff]
  %v336 = vld [vmem:[%s7 + $0x18] sm:$0xff]
  %v337 = vld [vmem:[%s8] sm:$0x1]
  %v339 = vlaneseq
  %v340 = vshrl.u32 %v339, 7
  %v341 = vsub.s32 0, %v340
  %v342 = vrot.slane %v337, %v341
  %vm344 = vcmask 261120
  %v346 = vsel %vm344, %v330, 0
  %348 = vmatprep.subr.mxu0 0.0
  %349 = vmatpush1.msra.mxu0 %v333
  %350 = vmatprep.subr.mxu0 0.0
  %351 = vmatpush1.msra.mxu0 %v334
  %352 = vmatprep.subr.mxu0 0.0
  %353 = vmatpush1.msra.mxu0 %v335
  %354 = vmatprep.subr.mxu0 0.0
  %355 = vmatpush1.msra.mxu0 %v336
  %356 = vmatprep.subr.mxu0 0.0
  %357 = vmatpush1.msra.mxu0 0.0
  %358 = vmatprep.subr.mxu0 0.0
  %359 = vmatpush1.msra.mxu0 0.0
  %360 = vmatprep.subr.mxu0 0.0
  %361 = vmatpush1.msra.mxu0 0.0
  %362 = vmatprep.subr.mxu0 0.0
  %363 = vmatpush1.msra.mxu0 0.0
  %364 = vmatprep.subr.mxu0 0.0
  %365 = vmatpush1.msra.mxu0 0.0
  %366 = vmatprep.subr.mxu0 0.0
  %367 = vmatpush1.msra.mxu0 0.0
  %368 = vmatprep.subr.mxu0 0.0
  %369 = vmatpush1.msra.mxu0 0.0
  %370 = vmatprep.subr.mxu0 0.0
  %371 = vmatpush1.msra.mxu0 0.0
  %372 = vmatprep.subr.mxu0 0.0
  %373 = vmatpush1.msra.mxu0 0.0
  %374 = vmatprep.subr.mxu0 0.0
  %375 = vmatpush1.msra.mxu0 0.0
  %376 = vmatprep.subr.mxu0 0.0
  %377 = vmatpush1.msra.mxu0 0.0
  %378 = vmatprep.subr.mxu0 0.0
  %379 = vmatpush1.msra.mxu0 0.0
  %380 = vmatprep.subr.mxu0 0.0
  %381 = vmatpush1.msra.mxu0 0.0
  %382 = vmatprep.subr.mxu0 0.0
  %383 = vmatpush1.msra.mxu0 0.0
  %384 = vmatprep.subr.mxu0 0.0
  %385 = vmatpush1.msra.mxu0 0.0
  %386 = vmatprep.subr.mxu0 0.0
  %387 = vmatpush1.msra.mxu0 0.0
  %388 = vmatprep.subr.mxu0 0.0
  %389 = vmatpush1.msra.mxu0 0.0
  %390 = vmatprep.subr.mxu0 0.0
  %391 = vmatpush1.msra.mxu0 0.0
  %392 = vmatprep.subr.mxu0 0.0
  %393 = vmatpush1.msra.mxu0 0.0
  %394 = vmatprep.subr.mxu0 0.0
  %395 = vmatpush1.msra.mxu0 0.0
  %396 = vmatprep.subr.mxu0 0.0
  %397 = vmatpush1.msra.mxu0 0.0
  %398 = vmatprep.subr.mxu0 0.0
  %399 = vmatpush1.msra.mxu0 0.0
  %400 = vmatprep.subr.mxu0 0.0
  %401 = vmatpush1.msra.mxu0 0.0
  %402 = vmatprep.subr.mxu0 0.0
  %403 = vmatpush1.msra.mxu0 0.0
  %404 = vmatprep.subr.mxu0 0.0
  %405 = vmatpush1.msra.mxu0 0.0
  %406 = vmatprep.subr.mxu0 0.0
  %407 = vmatpush1.msra.mxu0 0.0
  %408 = vmatprep.subr.mxu0 0.0
  %409 = vmatpush1.msra.mxu0 0.0
  %410 = vmatprep.subr.mxu0 0.0
  %411 = vmatpush1.msra.mxu0 0.0
  %412 = vmatprep.mubr.f32.mxu0 0.0
  %413 = vmatmul.mubr.f32.gmra.mrb[0].mxu0 %v346
  %v414 = vpop.f32.mrb[0].mxu0
  %v415 = vadd.f32 %v342, %v414
  %v416 = vpop.f32.mrb[0].mxu0
  %417 = vdwg.mxu0
  %v418 = vmul.f32 %v415, %v415
  %v419 = vmul.f32 %v415, %v418
  %v420 = vmul.f32 %v419, 0.044715
  %v421 = vadd.f32 %v415, %v420
  %v422 = vmul.f32 %v421, 0.7978846
  %v423 = vtanh.pop %v422
  %v424 = vadd.f32 %v423, 1.0
  %v425 = vmul.f32 %v424, 0.5
  %v426 = vmul.f32 %v415, %v425
  %vm427 = vcmask 517120
  %428 = vst.msk [vmem:[#allocation2] sm:$0x3] %vm427, %v147
  %429 = vst.msk [vmem:[#allocation2 + $0x2] sm:$0x3] %vm427, %v426
  %431 = vrot.lane.b32.xlu0 %v147, 64
  %v432 = vpop.permute.xlu0 %431
  %434 = vst.msk [vmem:[#allocation2 + $0x4] sm:$0x3] %vm427, %v432
  %v435 = vld [vmem:[#allocation2] sm:$0x3f]
  %v436 = vld [vmem:[%s9] sm:$0xff]
  %v437 = vld [vmem:[%s9 + $0x8] sm:$0xff]
  %v438 = vld [vmem:[%s9 + $0x10] sm:$0xff]
  %v439 = vld [vmem:[%s9 + $0x18] sm:$0xff]
  %v440 = vld [vmem:[%s9 + $0x20] sm:$0xff]
  %v441 = vld [vmem:[%s9 + $0x28] sm:$0xff]
  %v442 = vld [vmem:[%s9 + $0x30] sm:$0xff]
  %v443 = vld [vmem:[%s9 + $0x38] sm:$0xff]
  %v444 = vld [vmem:[%s9 + $0x40] sm:$0xff]
  %v445 = vld [vmem:[%s9 + $0x48] sm:$0xff]
  %v446 = vld [vmem:[%s9 + $0x50] sm:$0xff]
  %v447 = vld [vmem:[%s9 + $0x58] sm:$0xff]
  %v448 = vld [vmem:[%s9 + $0x60] sm:$0xff]
  %v449 = vld [vmem:[%s9 + $0x68] sm:$0xff]
  %v450 = vld [vmem:[%s9 + $0x70] sm:$0xff]
  %v451 = vld [vmem:[%s9 + $0x78] sm:$0xff]
  %v452 = vld [vmem:[%s10] sm:$0x3]
  %v454 = vlaneseq
  %v455 = vshrl.u32 %v454, 7
  %v456 = vsub.s32 0, %v455
  %v457 = vrot.slane %v452, %v456
  %v458 = vlaneseq
  %v459 = vshrl.u32 %v458, 7
  %v460 = vsub.s32 1, %v459
  %v461 = vrot.slane %v452, %v460
  %v465 = vsel %vm259, %v435, 0
  %467 = vmatprep.subr.mxu0 %v437
  %468 = vmatpush1.msra.mxu0 %v436
  %469 = vmatprep.subr.mxu0 %v439
  %470 = vmatpush1.msra.mxu0 %v438
  %471 = vmatprep.subr.mxu0 %v441
  %472 = vmatpush1.msra.mxu0 %v440
  %473 = vmatprep.subr.mxu0 %v443
  %474 = vmatpush1.msra.mxu0 %v442
  %475 = vmatprep.subr.mxu0 %v445
  %476 = vmatpush1.msra.mxu0 %v444
  %477 = vmatprep.subr.mxu0 %v447
  %478 = vmatpush1.msra.mxu0 %v446
  %479 = vmatprep.subr.mxu0 %v449
  %480 = vmatpush1.msra.mxu0 %v448
  %481 = vmatprep.subr.mxu0 %v451
  %482 = vmatpush1.msra.mxu0 %v450
  %483 = vmatprep.subr.mxu0 0.0
  %484 = vmatpush1.msra.mxu0 0.0
  %485 = vmatprep.subr.mxu0 0.0
  %486 = vmatpush1.msra.mxu0 0.0
  %487 = vmatprep.subr.mxu0 0.0
  %488 = vmatpush1.msra.mxu0 0.0
  %489 = vmatprep.subr.mxu0 0.0
  %490 = vmatpush1.msra.mxu0 0.0
  %491 = vmatprep.subr.mxu0 0.0
  %492 = vmatpush1.msra.mxu0 0.0
  %493 = vmatprep.subr.mxu0 0.0
  %494 = vmatpush1.msra.mxu0 0.0
  %495 = vmatprep.subr.mxu0 0.0
  %496 = vmatpush1.msra.mxu0 0.0
  %497 = vmatprep.subr.mxu0 0.0
  %498 = vmatpush1.msra.mxu0 0.0
  %499 = vmatprep.subr.mxu0 0.0
  %500 = vmatpush1.msra.mxu0 0.0
  %501 = vmatprep.subr.mxu0 0.0
  %502 = vmatpush1.msra.mxu0 0.0
  %503 = vmatprep.subr.mxu0 0.0
  %504 = vmatpush1.msra.mxu0 0.0
  %505 = vmatprep.subr.mxu0 0.0
  %506 = vmatpush1.msra.mxu0 0.0
  %507 = vmatprep.subr.mxu0 0.0
  %508 = vmatpush1.msra.mxu0 0.0
  %509 = vmatprep.subr.mxu0 0.0
  %510 = vmatpush1.msra.mxu0 0.0
  %511 = vmatprep.subr.mxu0 0.0
  %512 = vmatpush1.msra.mxu0 0.0
  %513 = vmatprep.subr.mxu0 0.0
  %514 = vmatpush1.msra.mxu0 0.0
  %515 = vmatprep.subr.mxu0 0.0
  %516 = vmatpush1.msra.mxu0 0.0
  %517 = vmatprep.subr.mxu0 0.0
  %518 = vmatpush1.msra.mxu0 0.0
  %519 = vmatprep.subr.mxu0 0.0
  %520 = vmatpush1.msra.mxu0 0.0
  %521 = vmatprep.subr.mxu0 0.0
  %522 = vmatpush1.msra.mxu0 0.0
  %523 = vmatprep.subr.mxu0 0.0
  %524 = vmatpush1.msra.mxu0 0.0
  %525 = vmatprep.subr.mxu0 0.0
  %526 = vmatpush1.msra.mxu0 0.0
  %527 = vmatprep.subr.mxu0 0.0
  %528 = vmatpush1.msra.mxu0 0.0
  %529 = vmatprep.subr.mxu0 0.0
  %530 = vmatpush1.msra.mxu0 0.0
  %531 = vmatprep.mubr.f32.mxu0 0.0
  %532 = vmatmul.mubr.f32.gmra.mrb[0].mxu0 %v465
  %v533 = vpop.f32.mrb[0].mxu0
  %v534 = vadd.f32 %v457, %v533
  %v535 = vpop.f32.mrb[0].mxu0
  %v536 = vadd.f32 %v461, %v535
  %537 = vdwg.mxu0
  %v538 = vld [vmem:[%s11] sm:$0x3f]
  %540 = vrot.lane.b32.xlu0 %v534, 64
  %v541 = vpop.permute.xlu0 %540
  %v542 = vsel %vm153, %v534, 0
  %v544 = vsel %vm153, %v541, 0
  %546 = vmatprep.subr.mxu0 0.0
  %547 = vmatpush1.xpose.msra.mxu0 %v544
  %548 = vmatprep.subr.mxu0 0.0
  %549 = vmatpush1.xpose.msra.mxu0 0.0
  %550 = vmatprep.subr.mxu0 0.0
  %551 = vmatpush1.xpose.msra.mxu0 0.0
  %552 = vmatprep.subr.mxu0 0.0
  %553 = vmatpush1.xpose.msra.mxu0 0.0
  %554 = vmatprep.subr.mxu0 0.0
  %555 = vmatpush1.xpose.msra.mxu0 0.0
  %556 = vmatprep.subr.mxu0 0.0
  %557 = vmatpush1.xpose.msra.mxu0 0.0
  %558 = vmatprep.subr.mxu0 0.0
  %559 = vmatpush1.xpose.msra.mxu0 0.0
  %560 = vmatprep.subr.mxu0 0.0
  %561 = vmatpush1.xpose.msra.mxu0 0.0
  %562 = vmatprep.subr.mxu0 0.0
  %563 = vmatpush1.xpose.msra.mxu0 0.0
  %564 = vmatprep.subr.mxu0 0.0
  %565 = vmatpush1.xpose.msra.mxu0 0.0
  %566 = vmatprep.subr.mxu0 0.0
  %567 = vmatpush1.xpose.msra.mxu0 0.0
  %568 = vmatprep.subr.mxu0 0.0
  %569 = vmatpush1.xpose.msra.mxu0 0.0
  %570 = vmatprep.subr.mxu0 0.0
  %571 = vmatpush1.xpose.msra.mxu0 0.0
  %572 = vmatprep.subr.mxu0 0.0
  %573 = vmatpush1.xpose.msra.mxu0 0.0
  %574 = vmatprep.subr.mxu0 0.0
  %575 = vmatpush1.xpose.msra.mxu0 0.0
  %576 = vmatprep.subr.mxu0 0.0
  %577 = vmatpush1.xpose.msra.mxu0 0.0
  %578 = vmatprep.subr.mxu0 0.0
  %579 = vmatpush1.xpose.msra.mxu0 0.0
  %580 = vmatprep.subr.mxu0 0.0
  %581 = vmatpush1.xpose.msra.mxu0 0.0
  %582 = vmatprep.subr.mxu0 0.0
  %583 = vmatpush1.xpose.msra.mxu0 0.0
  %584 = vmatprep.subr.mxu0 0.0
  %585 = vmatpush1.xpose.msra.mxu0 0.0
  %586 = vmatprep.subr.mxu0 0.0
  %587 = vmatpush1.xpose.msra.mxu0 0.0
  %588 = vmatprep.subr.mxu0 0.0
  %589 = vmatpush1.xpose.msra.mxu0 0.0
  %590 = vmatprep.subr.mxu0 0.0
  %591 = vmatpush1.xpose.msra.mxu0 0.0
  %592 = vmatprep.subr.mxu0 0.0
  %593 = vmatpush1.xpose.msra.mxu0 0.0
  %594 = vmatprep.subr.mxu0 0.0
  %595 = vmatpush1.xpose.msra.mxu0 0.0
  %596 = vmatprep.subr.mxu0 0.0
  %597 = vmatpush1.xpose.msra.mxu0 0.0
  %598 = vmatprep.subr.mxu0 0.0
  %599 = vmatpush1.xpose.msra.mxu0 0.0
  %600 = vmatprep.subr.mxu0 0.0
  %601 = vmatpush1.xpose.msra.mxu0 0.0
  %602 = vmatprep.subr.mxu0 0.0
  %603 = vmatpush1.xpose.msra.mxu0 0.0
  %604 = vmatprep.subr.mxu0 0.0
  %605 = vmatpush1.xpose.msra.mxu0 0.0
  %606 = vmatprep.subr.mxu0 0.0
  %607 = vmatpush1.xpose.msra.mxu0 0.0
  %608 = vmatprep.subr.mxu0 0.0
  %609 = vmatpush1.xpose.msra.mxu0 0.0
  %610 = vmatprep.mubr.f32.mxu0 0.0
  %611 = vmatmul.mubr.f32.gmra.mrb[0].mxu0 %v542
  %v612 = vpop.f32.mrb[0].mxu0
  %v613 = vadd.f32 0.0, %v612
  %v614 = vpop.f32.mrb[0].mxu0
  %615 = vdwg.mxu0
  %v616 = vmul.f32 %v613, 0.25
  %v617 = vadd.f32 %v616, %v538
  %vm618 = vcmask 46080
  %v619 = vsel %vm618, %v617, -inf
  %620 = vmax.xlane.f32.xlu0 %v619
  %v621 = vpop.xlane.xlu0 %620
  %v622 = vsub.f32 %v617, %v621
  %v623 = vmul.f32 %v622, 1.442695
  %v624 = vpow.pop %v623
  %v625 = vsel %vm618, %v624, 0.0
  %626 = vadd.xlane.f32.xlu0 %v625
  %v627 = vpop.xlane.xlu0 %626
  %v628 = vrcp.pop %v627
  %v629 = vmul.f32 %v624, %v628
  %vm630 = vcmask 48128
  %v632 = vsel %vm630, %v629, 0
  %vm634 = vcmask 1045504
  %v636 = vsel %vm634, %v536, 0
  %638 = vmatprep.subr.mxu0 0.0
  %639 = vmatpush1.msra.mxu0 %v636
  %640 = vmatprep.subr.mxu0 0.0
  %641 = vmatpush1.msra.mxu0 0.0
  %642 = vmatprep.subr.mxu0 0.0
  %643 = vmatpush1.msra.mxu0 0.0
  %644 = vmatprep.subr.mxu0 0.0
  %645 = vmatpush1.msra.mxu0 0.0
  %646 = vmatprep.subr.mxu0 0.0
  %647 = vmatpush1.msra.mxu0 0.0
  %648 = vmatprep.subr.mxu0 0.0
  %649 = vmatpush1.msra.mxu0 0.0
  %650 = vmatprep.subr.mxu0 0.0
  %651 = vmatpush1.msra.mxu0 0.0
  %652 = vmatprep.subr.mxu0 0.0
  %653 = vmatpush1.msra.mxu0 0.0
  %654 = vmatprep.subr.mxu0 0.0
  %655 = vmatpush1.msra.mxu0 0.0
  %656 = vmatprep.subr.mxu0 0.0
  %657 = vmatpush1.msra.mxu0 0.0
  %658 = vmatprep.subr.mxu0 0.0
  %659 = vmatpush1.msra.mxu0 0.0
  %660 = vmatprep.subr.mxu0 0.0
  %661 = vmatpush1.msra.mxu0 0.0
  %662 = vmatprep.subr.mxu0 0.0
  %663 = vmatpush1.msra.mxu0 0.0
  %664 = vmatprep.subr.mxu0 0.0
  %665 = vmatpush1.msra.mxu0 0.0
  %666 = vmatprep.subr.mxu0 0.0
  %667 = vmatpush1.msra.mxu0 0.0
  %668 = vmatprep.subr.mxu0 0.0
  %669 = vmatpush1.msra.mxu0 0.0
  %670 = vmatprep.subr.mxu0 0.0
  %671 = vmatpush1.msra.mxu0 0.0
  %672 = vmatprep.subr.mxu0 0.0
  %673 = vmatpush1.msra.mxu0 0.0
  %674 = vmatprep.subr.mxu0 0.0
  %675 = vmatpush1.msra.mxu0 0.0
  %676 = vmatprep.subr.mxu0 0.0
  %677 = vmatpush1.msra.mxu0 0.0
  %678 = vmatprep.subr.mxu0 0.0
  %679 = vmatpush1.msra.mxu0 0.0
  %680 = vmatprep.subr.mxu0 0.0
  %681 = vmatpush1.msra.mxu0 0.0
  %682 = vmatprep.subr.mxu0 0.0
  %683 = vmatpush1.msra.mxu0 0.0
  %684 = vmatprep.subr.mxu0 0.0
  %685 = vmatpush1.msra.mxu0 0.0
  %686 = vmatprep.subr.mxu0 0.0
  %687 = vmatpush1.msra.mxu0 0.0
  %688 = vmatprep.subr.mxu0 0.0
  %689 = vmatpush1.msra.mxu0 0.0
  %690 = vmatprep.subr.mxu0 0.0
  %691 = vmatpush1.msra.mxu0 0.0
  %692 = vmatprep.subr.mxu0 0.0
  %693 = vmatpush1.msra.mxu0 0.0
  %694 = vmatprep.subr.mxu0 0.0
  %695 = vmatpush1.msra.mxu0 0.0
  %696 = vmatprep.subr.mxu0 0.0
  %697 = vmatpush1.msra.mxu0 0.0
  %698 = vmatprep.subr.mxu0 0.0
  %699 = vmatpush1.msra.mxu0 0.0
  %700 = vmatprep.subr.mxu0 0.0
  %701 = vmatpush1.msra.mxu0 0.0
  %702 = vmatprep.mubr.f32.mxu0 0.0
  %703 = vmatmul.mubr.f32.gmra.mrb[0].mxu0 %v632
  %v704 = vpop.f32.mrb[0].mxu0
  %v705 = vadd.f32 0.0, %v704
  %v706 = vpop.f32.mrb[0].mxu0
  %707 = vdwg.mxu0
  %vm708 = vcmask 128000
  %709 = vst.msk [vmem:[#allocation3] sm:$0x3f] %vm708, %v705
  %710 = vrot.lane.b32.xlu0 %v534, 112
  %v711 = vpop.permute.xlu0 %710
  %712 = vrot.lane.b32.xlu0 %v534, 48
  %v713 = vpop.permute.xlu0 %712
  %v714 = vsel %vm153, %v711, 0
  %v716 = vsel %vm153, %v713, 0
  %718 = vmatprep.subr.mxu0 0.0
  %719 = vmatpush1.xpose.msra.mxu0 %v716
  %720 = vmatprep.subr.mxu0 0.0
  %721 = vmatpush1.xpose.msra.mxu0 0.0
  %722 = vmatprep.subr.mxu0 0.0
  %723 = vmatpush1.xpose.msra.mxu0 0.0
  %724 = vmatprep.subr.mxu0 0.0
  %725 = vmatpush1.xpose.msra.mxu0 0.0
  %726 = vmatprep.subr.mxu0 0.0
  %727 = vmatpush1.xpose.msra.mxu0 0.0
  %728 = vmatprep.subr.mxu0 0.0
  %729 = vmatpush1.xpose.msra.mxu0 0.0
  %730 = vmatprep.subr.mxu0 0.0
  %731 = vmatpush1.xpose.msra.mxu0 0.0
  %732 = vmatprep.subr.mxu0 0.0
  %733 = vmatpush1.xpose.msra.mxu0 0.0
  %734 = vmatprep.subr.mxu0 0.0
  %735 = vmatpush1.xpose.msra.mxu0 0.0
  %736 = vmatprep.subr.mxu0 0.0
  %737 = vmatpush1.xpose.msra.mxu0 0.0
  %738 = vmatprep.subr.mxu0 0.0
  %739 = vmatpush1.xpose.msra.mxu0 0.0
  %740 = vmatprep.subr.mxu0 0.0
  %741 = vmatpush1.xpose.msra.mxu0 0.0
  %742 = vmatprep.subr.mxu0 0.0
  %743 = vmatpush1.xpose.msra.mxu0 0.0
  %744 = vmatprep.subr.mxu0 0.0
  %745 = vmatpush1.xpose.msra.mxu0 0.0
  %746 = vmatprep.subr.mxu0 0.0
  %747 = vmatpush1.xpose.msra.mxu0 0.0
  %748 = vmatprep.subr.mxu0 0.0
  %749 = vmatpush1.xpose.msra.mxu0 0.0
  %750 = vmatprep.subr.mxu0 0.0
  %751 = vmatpush1.xpose.msra.mxu0 0.0
  %752 = vmatprep.subr.mxu0 0.0
  %753 = vmatpush1.xpose.msra.mxu0 0.0
  %754 = vmatprep.subr.mxu0 0.0
  %755 = vmatpush1.xpose.msra.mxu0 0.0
  %756 = vmatprep.subr.mxu0 0.0
  %757 = vmatpush1.xpose.msra.mxu0 0.0
  %758 = vmatprep.subr.mxu0 0.0
  %759 = vmatpush1.xpose.msra.mxu0 0.0
  %760 = vmatprep.subr.mxu0 0.0
  %761 = vmatpush1.xpose.msra.mxu0 0.0
  %762 = vmatprep.subr.mxu0 0.0
  %763 = vmatpush1.xpose.msra.mxu0 0.0
  %764 = vmatprep.subr.mxu0 0.0
  %765 = vmatpush1.xpose.msra.mxu0 0.0
  %766 = vmatprep.subr.mxu0 0.0
  %767 = vmatpush1.xpose.msra.mxu0 0.0
  %768 = vmatprep.subr.mxu0 0.0
  %769 = vmatpush1.xpose.msra.mxu0 0.0
  %770 = vmatprep.subr.mxu0 0.0
  %771 = vmatpush1.xpose.msra.mxu0 0.0
  %772 = vmatprep.subr.mxu0 0.0
  %773 = vmatpush1.xpose.msra.mxu0 0.0
  %774 = vmatprep.subr.mxu0 0.0
  %775 = vmatpush1.xpose.msra.mxu0 0.0
  %776 = vmatprep.subr.mxu0 0.0
  %777 = vmatpush1.xpose.msra.mxu0 0.0
  %778 = vmatprep.subr.mxu0 0.0
  %779 = vmatpush1.xpose.msra.mxu0 0.0
  %780 = vmatprep.subr.mxu0 0.0
  %781 = vmatpush1.xpose.msra.mxu0 0.0
  %782 = vmatprep.mubr.f32.mxu0 0.0
  %783 = vmatmul.mubr.f32.gmra.mrb[0].mxu0 %v714
  %v784 = vpop.f32.mrb[0].mxu0
  %v785 = vadd.f32 0.0, %v784
  %v786 = vpop.f32.mrb[0].mxu0
  %787 = vdwg.mxu0
  %v788 = vmul.f32 %v785, 0.25
  %v789 = vadd.f32 %v788, %v538
  %v790 = vsel %vm618, %v789, -inf
  %791 = vmax.xlane.f32.xlu0 %v790
  %v792 = vpop.xlane.xlu0 %791
  %v793 = vsub.f32 %v789, %v792
  %v794 = vmul.f32 %v793, 1.442695
  %v795 = vpow.pop %v794
  %v796 = vsel %vm618, %v795, 0.0
  %797 = vadd.xlane.f32.xlu0 %v796
  %v798 = vpop.xlane.xlu0 %797
  %v799 = vrcp.pop %v798
  %v800 = vmul.f32 %v795, %v799
  %801 = vrot.lane.b32.xlu0 %v536, 112
  %v802 = vpop.permute.xlu0 %801
  %v804 = vsel %vm630, %v800, 0
  %v806 = vsel %vm634, %v802, 0
  %808 = vmatprep.subr.mxu0 0.0
  %809 = vmatpush1.msra.mxu0 %v806
  %810 = vmatprep.subr.mxu0 0.0
  %811 = vmatpush1.msra.mxu0 0.0
  %812 = vmatprep.subr.mxu0 0.0
  %813 = vmatpush1.msra.mxu0 0.0
  %814 = vmatprep.subr.mxu0 0.0
  %815 = vmatpush1.msra.mxu0 0.0
  %816 = vmatprep.subr.mxu0 0.0
  %817 = vmatpush1.msra.mxu0 0.0
  %818 = vmatprep.subr.mxu0 0.0
  %819 = vmatpush1.msra.mxu0 0.0
  %820 = vmatprep.subr.mxu0 0.0
  %821 = vmatpush1.msra.mxu0 0.0
  %822 = vmatprep.subr.mxu0 0.0
  %823 = vmatpush1.msra.mxu0 0.0
  %824 = vmatprep.subr.mxu0 0.0
  %825 = vmatpush1.msra.mxu0 0.0
  %826 = vmatprep.subr.mxu0 0.0
  %827 = vmatpush1.msra.mxu0 0.0
  %828 = vmatprep.subr.mxu0 0.0
  %829 = vmatpush1.msra.mxu0 0.0
  %830 = vmatprep.subr.mxu0 0.0
  %831 = vmatpush1.msra.mxu0 0.0
  %832 = vmatprep.subr.mxu0 0.0
  %833 = vmatpush1.msra.mxu0 0.0
  %834 = vmatprep.subr.mxu0 0.0
  %835 = vmatpush1.msra.mxu0 0.0
  %836 = vmatprep.subr.mxu0 0.0
  %837 = vmatpush1.msra.mxu0 0.0
  %838 = vmatprep.subr.mxu0 0.0
  %839 = vmatpush1.msra.mxu0 0.0
  %840 = vmatprep.subr.mxu0 0.0
  %841 = vmatpush1.msra.mxu0 0.0
  %842 = vmatprep.subr.mxu0 0.0
  %843 = vmatpush1.msra.mxu0 0.0
  %844 = vmatprep.subr.mxu0 0.0
  %845 = vmatpush1.msra.mxu0 0.0
  %846 = vmatprep.subr.mxu0 0.0
  %847 = vmatpush1.msra.mxu0 0.0
  %848 = vmatprep.subr.mxu0 0.0
  %849 = vmatpush1.msra.mxu0 0.0
  %850 = vmatprep.subr.mxu0 0.0
  %851 = vmatpush1.msra.mxu0 0.0
  %852 = vmatprep.subr.mxu0 0.0
  %853 = vmatpush1.msra.mxu0 0.0
  %854 = vmatprep.subr.mxu0 0.0
  %855 = vmatpush1.msra.mxu0 0.0
  %856 = vmatprep.subr.mxu0 0.0
  %857 = vmatpush1.msra.mxu0 0.0
  %858 = vmatprep.subr.mxu0 0.0
  %859 = vmatpush1.msra.mxu0 0.0
  %860 = vmatprep.subr.mxu0 0.0
  %861 = vmatpush1.msra.mxu0 0.0
  %862 = vmatprep.subr.mxu0 0.0
  %863 = vmatpush1.msra.mxu0 0.0
  %864 = vmatprep.subr.mxu0 0.0
  %865 = vmatpush1.msra.mxu0 0.0
  %866 = vmatprep.subr.mxu0 0.0
  %867 = vmatpush1.msra.mxu0 0.0
  %868 = vmatprep.subr.mxu0 0.0
  %869 = vmatpush1.msra.mxu0 0.0
  %870 = vmatprep.subr.mxu0 0.0
  %871 = vmatpush1.msra.mxu0 0.0
  %872 = vmatprep.mubr.f32.mxu0 0.0
  %873 = vmatmul.mubr.f32.gmra.mrb[0].mxu0 %v804
  %v874 = vpop.f32.mrb[0].mxu0
  %v875 = vadd.f32 0.0, %v874
  %v876 = vpop.f32.mrb[0].mxu0
  %877 = vdwg.mxu0
  %879 = vrot.lane.b32.xlu0 %v875, 16
  %v880 = vpop.permute.xlu0 %879
  %vm882 = vcmask 259200
  %883 = vst.msk [vmem:[#allocation3] sm:$0x3f] %vm882, %v880
  %884 = vrot.lane.b32.xlu0 %v534, 96
  %v885 = vpop.permute.xlu0 %884
  %886 = vrot.lane.b32.xlu0 %v534, 32
  %v887 = vpop.permute.xlu0 %886
  %v888 = vsel %vm153, %v885, 0
  %v890 = vsel %vm153, %v887, 0
  %892 = vmatprep.subr.mxu0 0.0
  %893 = vmatpush1.xpose.msra.mxu0 %v890
  %894 = vmatprep.subr.mxu0 0.0
  %895 = vmatpush1.xpose.msra.mxu0 0.0
  %896 = vmatprep.subr.mxu0 0.0
  %897 = vmatpush1.xpose.msra.mxu0 0.0
  %898 = vmatprep.subr.mxu0 0.0
  %899 = vmatpush1.xpose.msra.mxu0 0.0
  %900 = vmatprep.subr.mxu0 0.0
  %901 = vmatpush1.xpose.msra.mxu0 0.0
  %902 = vmatprep.subr.mxu0 0.0
  %903 = vmatpush1.xpose.msra.mxu0 0.0
  %904 = vmatprep.subr.mxu0 0.0
  %905 = vmatpush1.xpose.msra.mxu0 0.0
  %906 = vmatprep.subr.mxu0 0.0
  %907 = vmatpush1.xpose.msra.mxu0 0.0
  %908 = vmatprep.subr.mxu0 0.0
  %909 = vmatpush1.xpose.msra.mxu0 0.0
  %910 = vmatprep.subr.mxu0 0.0
  %911 = vmatpush1.xpose.msra.mxu0 0.0
  %912 = vmatprep.subr.mxu0 0.0
  %913 = vmatpush1.xpose.msra.mxu0 0.0
  %914 = vmatprep.subr.mxu0 0.0
  %915 = vmatpush1.xpose.msra.mxu0 0.0
  %916 = vmatprep.subr.mxu0 0.0
  %917 = vmatpush1.xpose.msra.mxu0 0.0
  %918 = vmatprep.subr.mxu0 0.0
  %919 = vmatpush1.xpose.msra.mxu0 0.0
  %920 = vmatprep.subr.mxu0 0.0
  %921 = vmatpush1.xpose.msra.mxu0 0.0
  %922 = vmatprep.subr.mxu0 0.0
  %923 = vmatpush1.xpose.msra.mxu0 0.0
  %924 = vmatprep.subr.mxu0 0.0
  %925 = vmatpush1.xpose.msra.mxu0 0.0
  %926 = vmatprep.subr.mxu0 0.0
  %927 = vmatpush1.xpose.msra.mxu0 0.0
  %928 = vmatprep.subr.mxu0 0.0
  %929 = vmatpush1.xpose.msra.mxu0 0.0
  %930 = vmatprep.subr.mxu0 0.0
  %931 = vmatpush1.xpose.msra.mxu0 0.0
  %932 = vmatprep.subr.mxu0 0.0
  %933 = vmatpush1.xpose.msra.mxu0 0.0
  %934 = vmatprep.subr.mxu0 0.0
  %935 = vmatpush1.xpose.msra.mxu0 0.0
  %936 = vmatprep.subr.mxu0 0.0
  %937 = vmatpush1.xpose.msra.mxu0 0.0
  %938 = vmatprep.subr.mxu0 0.0
  %939 = vmatpush1.xpose.msra.mxu0 0.0
  %940 = vmatprep.subr.mxu0 0.0
  %941 = vmatpush1.xpose.msra.mxu0 0.0
  %942 = vmatprep.subr.mxu0 0.0
  %943 = vmatpush1.xpose.msra.mxu0 0.0
  %944 = vmatprep.subr.mxu0 0.0
  %945 = vmatpush1.xpose.msra.mxu0 0.0
  %946 = vmatprep.subr.mxu0 0.0
  %947 = vmatpush1.xpose.msra.mxu0 0.0
  %948 = vmatprep.subr.mxu0 0.0
  %949 = vmatpush1.xpose.msra.mxu0 0.0
  %950 = vmatprep.subr.mxu0 0.0
  %951 = vmatpush1.xpose.msra.mxu0 0.0
  %952 = vmatprep.subr.mxu0 0.0
  %953 = vmatpush1.xpose.msra.mxu0 0.0
  %954 = vmatprep.subr.mxu0 0.0
  %955 = vmatpush1.xpose.msra.mxu0 0.0
  %956 = vmatprep.mubr.f32.mxu0 0.0
  %957 = vmatmul.mubr.f32.gmra.mrb[0].mxu0 %v888
  %v958 = vpop.f32.mrb[0].mxu0
  %v959 = vadd.f32 0.0, %v958
  %v960 = vpop.f32.mrb[0].mxu0
  %961 = vdwg.mxu0
  %v962 = vmul.f32 %v959, 0.25
  %v963 = vadd.f32 %v962, %v538
  %v964 = vsel %vm618, %v963, -inf
  %965 = vmax.xlane.f32.xlu0 %v964
  %v966 = vpop.xlane.xlu0 %965
  %v967 = vsub.f32 %v963, %v966
  %v968 = vmul.f32 %v967, 1.442695
  %v969 = vpow.pop %v968
  %v970 = vsel %vm618, %v969, 0.0
  %971 = vadd.xlane.f32.xlu0 %v970
  %v972 = vpop.xlane.xlu0 %971
  %v973 = vrcp.pop %v972
  %v974 = vmul.f32 %v969, %v973
  %975 = vrot.lane.b32.xlu0 %v536, 96
  %v976 = vpop.permute.xlu0 %975
  %v978 = vsel %vm630, %v974, 0
  %v980 = vsel %vm634, %v976, 0
  %982 = vmatprep.subr.mxu0 0.0
  %983 = vmatpush1.msra.mxu0 %v980
  %984 = vmatprep.subr.mxu0 0.0
  %985 = vmatpush1.msra.mxu0 0.0
  %986 = vmatprep.subr.mxu0 0.0
  %987 = vmatpush1.msra.mxu0 0.0
  %988 = vmatprep.subr.mxu0 0.0
  %989 = vmatpush1.msra.mxu0 0.0
  %990 = vmatprep.subr.mxu0 0.0
  %991 = vmatpush1.msra.mxu0 0.0
  %992 = vmatprep.subr.mxu0 0.0
  %993 = vmatpush1.msra.mxu0 0.0
  %994 = vmatprep.subr.mxu0 0.0
  %995 = vmatpush1.msra.mxu0 0.0
  %996 = vmatprep.subr.mxu0 0.0
  %997 = vmatpush1.msra.mxu0 0.0
  %998 = vmatprep.subr.mxu0 0.0
  %999 = vmatpush1.msra.mxu0 0.0
  %1000 = vmatprep.subr.mxu0 0.0
  %1001 = vmatpush1.msra.mxu0 0.0
  %1002 = vmatprep.subr.mxu0 0.0
  %1003 = vmatpush1.msra.mxu0 0.0
  %1004 = vmatprep.subr.mxu0 0.0
  %1005 = vmatpush1.msra.mxu0 0.0
  %1006 = vmatprep.subr.mxu0 0.0
  %1007 = vmatpush1.msra.mxu0 0.0
  %1008 = vmatprep.subr.mxu0 0.0
  %1009 = vmatpush1.msra.mxu0 0.0
  %1010 = vmatprep.subr.mxu0 0.0
  %1011 = vmatpush1.msra.mxu0 0.0
  %1012 = vmatprep.subr.mxu0 0.0
  %1013 = vmatpush1.msra.mxu0 0.0
  %1014 = vmatprep.subr.mxu0 0.0
  %1015 = vmatpush1.msra.mxu0 0.0
  %1016 = vmatprep.subr.mxu0 0.0
  %1017 = vmatpush1.msra.mxu0 0.0
  %1018 = vmatprep.subr.mxu0 0.0
  %1019 = vmatpush1.msra.mxu0 0.0
  %1020 = vmatprep.subr.mxu0 0.0
  %1021 = vmatpush1.msra.mxu0 0.0
  %1022 = vmatprep.subr.mxu0 0.0
  %1023 = vmatpush1.msra.mxu0 0.0
  %1024 = vmatprep.subr.mxu0 0.0
  %1025 = vmatpush1.msra.mxu0 0.0
  %1026 = vmatprep.subr.mxu0 0.0
  %1027 = vmatpush1.msra.mxu0 0.0
  %1028 = vmatprep.subr.mxu0 0.0
  %1029 = vmatpush1.msra.mxu0 0.0
  %1030 = vmatprep.subr.mxu0 0.0
  %1031 = vmatpush1.msra.mxu0 0.0
  %1032 = vmatprep.subr.mxu0 0.0
  %1033 = vmatpush1.msra.mxu0 0.0
  %1034 = vmatprep.subr.mxu0 0.0
  %1035 = vmatpush1.msra.mxu0 0.0
  %1036 = vmatprep.subr.mxu0 0.0
  %1037 = vmatpush1.msra.mxu0 0.0
  %1038 = vmatprep.subr.mxu0 0.0
  %1039 = vmatpush1.msra.mxu0 0.0
  %1040 = vmatprep.subr.mxu0 0.0
  %1041 = vmatpush1.msra.mxu0 0.0
  %1042 = vmatprep.subr.mxu0 0.0
  %1043 = vmatpush1.msra.mxu0 0.0
  %1044 = vmatprep.subr.mxu0 0.0
  %1045 = vmatpush1.msra.mxu0 0.0
  %1046 = vmatprep.mubr.f32.mxu0 0.0
  %1047 = vmatmul.mubr.f32.gmra.mrb[0].mxu0 %v978
  %v1048 = vpop.f32.mrb[0].mxu0
  %v1049 = vadd.f32 0.0, %v1048
  %v1050 = vpop.f32.mrb[0].mxu0
  %1051 = vdwg.mxu0
  %1053 = vrot.lane.b32.xlu0 %v1049, 32
  %v1054 = vpop.permute.xlu0 %1053
  %vm1056 = vcmask 390400
  %1057 = vst.msk [vmem:[#allocation3] sm:$0x3f] %vm1056, %v1054
  %1058 = vrot.lane.b32.xlu0 %v534, 80
  %v1059 = vpop.permute.xlu0 %1058
  %1060 = vrot.lane.b32.xlu0 %v534, 16
  %v1061 = vpop.permute.xlu0 %1060
  %v1062 = vsel %vm153, %v1059, 0
  %v1064 = vsel %vm153, %v1061, 0
  %1066 = vmatprep.subr.mxu0 0.0
  %1067 = vmatpush1.xpose.msra.mxu0 %v1064
  %1068 = vmatprep.subr.mxu0 0.0
  %1069 = vmatpush1.xpose.msra.mxu0 0.0
  %1070 = vmatprep.subr.mxu0 0.0
  %1071 = vmatpush1.xpose.msra.mxu0 0.0
  %1072 = vmatprep.subr.mxu0 0.0
  %1073 = vmatpush1.xpose.msra.mxu0 0.0
  %1074 = vmatprep.subr.mxu0 0.0
  %1075 = vmatpush1.xpose.msra.mxu0 0.0
  %1076 = vmatprep.subr.mxu0 0.0
  %1077 = vmatpush1.xpose.msra.mxu0 0.0
  %1078 = vmatprep.subr.mxu0 0.0
  %1079 = vmatpush1.xpose.msra.mxu0 0.0
  %1080 = vmatprep.subr.mxu0 0.0
  %1081 = vmatpush1.xpose.msra.mxu0 0.0
  %1082 = vmatprep.subr.mxu0 0.0
  %1083 = vmatpush1.xpose.msra.mxu0 0.0
  %1084 = vmatprep.subr.mxu0 0.0
  %1085 = vmatpush1.xpose.msra.mxu0 0.0
  %1086 = vmatprep.subr.mxu0 0.0
  %1087 = vmatpush1.xpose.msra.mxu0 0.0
  %1088 = vmatprep.subr.mxu0 0.0
  %1089 = vmatpush1.xpose.msra.mxu0 0.0
  %1090 = vmatprep.subr.mxu0 0.0
  %1091 = vmatpush1.xpose.msra.mxu0 0.0
  %1092 = vmatprep.subr.mxu0 0.0
  %1093 = vmatpush1.xpose.msra.mxu0 0.0
  %1094 = vmatprep.subr.mxu0 0.0
  %1095 = vmatpush1.xpose.msra.mxu0 0.0
  %1096 = vmatprep.subr.mxu0 0.0
  %1097 = vmatpush1.xpose.msra.mxu0 0.0
  %1098 = vmatprep.subr.mxu0 0.0
  %1099 = vmatpush1.xpose.msra.mxu0 0.0
  %1100 = vmatprep.subr.mxu0 0.0
  %1101 = vmatpush1.xpose.msra.mxu0 0.0
  %1102 = vmatprep.subr.mxu0 0.0
  %1103 = vmatpush1.xpose.msra.mxu0 0.0
  %1104 = vmatprep.subr.mxu0 0.0
  %1105 = vmatpush1.xpose.msra.mxu0 0.0
  %1106 = vmatprep.subr.mxu0 0.0
  %1107 = vmatpush1.xpose.msra.mxu0 0.0
  %1108 = vmatprep.subr.mxu0 0.0
  %1109 = vmatpush1.xpose.msra.mxu0 0.0
  %1110 = vmatprep.subr.mxu0 0.0
  %1111 = vmatpush1.xpose.msra.mxu0 0.0
  %1112 = vmatprep.subr.mxu0 0.0
  %1113 = vmatpush1.xpose.msra.mxu0 0.0
  %1114 = vmatprep.subr.mxu0 0.0
  %1115 = vmatpush1.xpose.msra.mxu0 0.0
  %1116 = vmatprep.subr.mxu0 0.0
  %1117 = vmatpush1.xpose.msra.mxu0 0.0
  %1118 = vmatprep.subr.mxu0 0.0
  %1119 = vmatpush1.xpose.msra.mxu0 0.0
  %1120 = vmatprep.subr.mxu0 0.0
  %1121 = vmatpush1.xpose.msra.mxu0 0.0
  %1122 = vmatprep.subr.mxu0 0.0
  %1123 = vmatpush1.xpose.msra.mxu0 0.0
  %1124 = vmatprep.subr.mxu0 0.0
  %1125 = vmatpush1.xpose.msra.mxu0 0.0
  %1126 = vmatprep.subr.mxu0 0.0
  %1127 = vmatpush1.xpose.msra.mxu0 0.0
  %1128 = vmatprep.subr.mxu0 0.0
  %1129 = vmatpush1.xpose.msra.mxu0 0.0
  %1130 = vmatprep.mubr.f32.mxu0 0.0
  %1131 = vmatmul.mubr.f32.gmra.mrb[0].mxu0 %v1062
  %v1132 = vpop.f32.mrb[0].mxu0
  %v1133 = vadd.f32 0.0, %v1132
  %v1134 = vpop.f32.mrb[0].mxu0
  %1135 = vdwg.mxu0
  %v1136 = vmul.f32 %v1133, 0.25
  %v1137 = vadd.f32 %v1136, %v538
  %v1138 = vsel %vm618, %v1137, -inf
  %1139 = vmax.xlane.f32.xlu0 %v1138
  %v1140 = vpop.xlane.xlu0 %1139
  %v1141 = vsub.f32 %v1137, %v1140
  %v1142 = vmul.f32 %v1141, 1.442695
  %v1143 = vpow.pop %v1142
  %v1144 = vsel %vm618, %v1143, 0.0
  %1145 = vadd.xlane.f32.xlu0 %v1144
  %v1146 = vpop.xlane.xlu0 %1145
  %v1147 = vrcp.pop %v1146
  %v1148 = vmul.f32 %v1143, %v1147
  %1149 = vrot.lane.b32.xlu0 %v536, 80
  %v1150 = vpop.permute.xlu0 %1149
  %v1152 = vsel %vm630, %v1148, 0
  %v1154 = vsel %vm634, %v1150, 0
  %1156 = vmatprep.subr.mxu0 0.0
  %1157 = vmatpush1.msra.mxu0 %v1154
  %1158 = vmatprep.subr.mxu0 0.0
  %1159 = vmatpush1.msra.mxu0 0.0
  %1160 = vmatprep.subr.mxu0 0.0
  %1161 = vmatpush1.msra.mxu0 0.0
  %1162 = vmatprep.subr.mxu0 0.0
  %1163 = vmatpush1.msra.mxu0 0.0
  %1164 = vmatprep.subr.mxu0 0.0
  %1165 = vmatpush1.msra.mxu0 0.0
  %1166 = vmatprep.subr.mxu0 0.0
  %1167 = vmatpush1.msra.mxu0 0.0
  %1168 = vmatprep.subr.mxu0 0.0
  %1169 = vmatpush1.msra.mxu0 0.0
  %1170 = vmatprep.subr.mxu0 0.0
  %1171 = vmatpush1.msra.mxu0 0.0
  %1172 = vmatprep.subr.mxu0 0.0
  %1173 = vmatpush1.msra.mxu0 0.0
  %1174 = vmatprep.subr.mxu0 0.0
  %1175 = vmatpush1.msra.mxu0 0.0
  %1176 = vmatprep.subr.mxu0 0.0
  %1177 = vmatpush1.msra.mxu0 0.0
  %1178 = vmatprep.subr.mxu0 0.0
  %1179 = vmatpush1.msra.mxu0 0.0
  %1180 = vmatprep.subr.mxu0 0.0
  %1181 = vmatpush1.msra.mxu0 0.0
  %1182 = vmatprep.subr.mxu0 0.0
  %1183 = vmatpush1.msra.mxu0 0.0
  %1184 = vmatprep.subr.mxu0 0.0
  %1185 = vmatpush1.msra.mxu0 0.0
  %1186 = vmatprep.subr.mxu0 0.0
  %1187 = vmatpush1.msra.mxu0 0.0
  %1188 = vmatprep.subr.mxu0 0.0
  %1189 = vmatpush1.msra.mxu0 0.0
  %1190 = vmatprep.subr.mxu0 0.0
  %1191 = vmatpush1.msra.mxu0 0.0
  %1192 = vmatprep.subr.mxu0 0.0
  %1193 = vmatpush1.msra.mxu0 0.0
  %1194 = vmatprep.subr.mxu0 0.0
  %1195 = vmatpush1.msra.mxu0 0.0
  %1196 = vmatprep.subr.mxu0 0.0
  %1197 = vmatpush1.msra.mxu0 0.0
  %1198 = vmatprep.subr.mxu0 0.0
  %1199 = vmatpush1.msra.mxu0 0.0
  %1200 = vmatprep.subr.mxu0 0.0
  %1201 = vmatpush1.msra.mxu0 0.0
  %1202 = vmatprep.subr.mxu0 0.0
  %1203 = vmatpush1.msra.mxu0 0.0
  %1204 = vmatprep.subr.mxu0 0.0
  %1205 = vmatpush1.msra.mxu0 0.0
  %1206 = vmatprep.subr.mxu0 0.0
  %1207 = vmatpush1.msra.mxu0 0.0
  %1208 = vmatprep.subr.mxu0 0.0
  %1209 = vmatpush1.msra.mxu0 0.0
  %1210 = vmatprep.subr.mxu0 0.0
  %1211 = vmatpush1.msra.mxu0 0.0
  %1212 = vmatprep.subr.mxu0 0.0
  %1213 = vmatpush1.msra.mxu0 0.0
  %1214 = vmatprep.subr.mxu0 0.0
  %1215 = vmatpush1.msra.mxu0 0.0
  %1216 = vmatprep.subr.mxu0 0.0
  %1217 = vmatpush1.msra.mxu0 0.0
  %1218 = vmatprep.subr.mxu0 0.0
  %1219 = vmatpush1.msra.mxu0 0.0
  %1220 = vmatprep.mubr.f32.mxu0 0.0
  %1221 = vmatmul.mubr.f32.gmra.mrb[0].mxu0 %v1152
  %v1222 = vpop.f32.mrb[0].mxu0
  %v1223 = vadd.f32 0.0, %v1222
  %v1224 = vpop.f32.mrb[0].mxu0
  %1225 = vdwg.mxu0
  %1227 = vrot.lane.b32.xlu0 %v1223, 48
  %v1228 = vpop.permute.xlu0 %1227
  %vm1230 = vcmask 521600
  %1231 = vst.msk [vmem:[#allocation3] sm:$0x3f] %vm1230, %v1228
  %v1232 = vld [vmem:[#allocation3] sm:$0x3f]
  %v1233 = vld [vmem:[%s12] sm:$0xff]
  %v1234 = vld [vmem:[%s12 + $0x8] sm:$0xff]
  %v1235 = vld [vmem:[%s12 + $0x10] sm:$0xff]
  %v1236 = vld [vmem:[%s12 + $0x18] sm:$0xff]
  %v1237 = vld [vmem:[%s12 + $0x20] sm:$0xff]
  %v1238 = vld [vmem:[%s12 + $0x28] sm:$0xff]
  %v1239 = vld [vmem:[%s12 + $0x30] sm:$0xff]
  %v1240 = vld [vmem:[%s12 + $0x38] sm:$0xff]
  %v1241 = vld [vmem:[%s13] sm:$0x1]
  %v1243 = vlaneseq
  %v1244 = vshrl.u32 %v1243, 7
  %v1245 = vsub.s32 0, %v1244
  %v1246 = vrot.slane %v1241, %v1245
  %v1249 = vsel %vm259, %v1232, 0
  %1251 = vmatprep.subr.mxu0 0.0
  %1252 = vmatpush1.msra.mxu0 %v1233
  %1253 = vmatprep.subr.mxu0 0.0
  %1254 = vmatpush1.msra.mxu0 %v1234
  %1255 = vmatprep.subr.mxu0 0.0
  %1256 = vmatpush1.msra.mxu0 %v1235
  %1257 = vmatprep.subr.mxu0 0.0
  %1258 = vmatpush1.msra.mxu0 %v1236
  %1259 = vmatprep.subr.mxu0 0.0
  %1260 = vmatpush1.msra.mxu0 %v1237
  %1261 = vmatprep.subr.mxu0 0.0
  %1262 = vmatpush1.msra.mxu0 %v1238
  %1263 = vmatprep.subr.mxu0 0.0
  %1264 = vmatpush1.msra.mxu0 %v1239
  %1265 = vmatprep.subr.mxu0 0.0
  %1266 = vmatpush1.msra.mxu0 %v1240
  %1267 = vmatprep.subr.mxu0 0.0
  %1268 = vmatpush1.msra.mxu0 0.0
  %1269 = vmatprep.subr.mxu0 0.0
  %1270 = vmatpush1.msra.mxu0 0.0
  %1271 = vmatprep.subr.mxu0 0.0
  %1272 = vmatpush1.msra.mxu0 0.0
  %1273 = vmatprep.subr.mxu0 0.0
  %1274 = vmatpush1.msra.mxu0 0.0
  %1275 = vmatprep.subr.mxu0 0.0
  %1276 = vmatpush1.msra.mxu0 0.0
  %1277 = vmatprep.subr.mxu0 0.0
  %1278 = vmatpush1.msra.mxu0 0.0
  %1279 = vmatprep.subr.mxu0 0.0
  %1280 = vmatpush1.msra.mxu0 0.0
  %1281 = vmatprep.subr.mxu0 0.0
  %1282 = vmatpush1.msra.mxu0 0.0
  %1283 = vmatprep.subr.mxu0 0.0
  %1284 = vmatpush1.msra.mxu0 0.0
  %1285 = vmatprep.subr.mxu0 0.0
  %1286 = vmatpush1.msra.mxu0 0.0
  %1287 = vmatprep.subr.mxu0 0.0
  %1288 = vmatpush1.msra.mxu0 0.0
  %1289 = vmatprep.subr.mxu0 0.0
  %1290 = vmatpush1.msra.mxu0 0.0
  %1291 = vmatprep.subr.mxu0 0.0
  %1292 = vmatpush1.msra.mxu0 0.0
  %1293 = vmatprep.subr.mxu0 0.0
  %1294 = vmatpush1.msra.mxu0 0.0
  %1295 = vmatprep.subr.mxu0 0.0
  %1296 = vmatpush1.msra.mxu0 0.0
  %1297 = vmatprep.subr.mxu0 0.0
  %1298 = vmatpush1.msra.mxu0 0.0
  %1299 = vmatprep.subr.mxu0 0.0
  %1300 = vmatpush1.msra.mxu0 0.0
  %1301 = vmatprep.subr.mxu0 0.0
  %1302 = vmatpush1.msra.mxu0 0.0
  %1303 = vmatprep.subr.mxu0 0.0
  %1304 = vmatpush1.msra.mxu0 0.0
  %1305 = vmatprep.subr.mxu0 0.0
  %1306 = vmatpush1.msra.mxu0 0.0
  %1307 = vmatprep.subr.mxu0 0.0
  %1308 = vmatpush1.msra.mxu0 0.0
  %1309 = vmatprep.subr.mxu0 0.0
  %1310 = vmatpush1.msra.mxu0 0.0
  %1311 = vmatprep.subr.mxu0 0.0
  %1312 = vmatpush1.msra.mxu0 0.0
  %1313 = vmatprep.subr.mxu0 0.0
  %1314 = vmatpush1.msra.mxu0 0.0
  %1315 = vmatprep.mubr.f32.mxu0 0.0
  %1316 = vmatmul.mubr.f32.gmra.mrb[0].mxu0 %v1249
  %v1317 = vpop.f32.mrb[0].mxu0
  %v1318 = vadd.f32 %v1246, %v1317
  %v1319 = vpop.f32.mrb[0].mxu0
  %1320 = vdwg.mxu0
  %v1321 = vxor.u32 %v1318, 2147483648
  %v1322 = vmul.f32 %v1321, 1.442695
  %v1323 = vpow.pop %v1322
  %v1324 = vadd.f32 %v1323, 1.0
  %v1325 = vrcp.pop %v1324
  %v1326 = vmul.f32 1.0, %v1325
  %1327 = vst [vmem:[%s14] sm:$0x3f] %v1326
  // Predicated region
  $region58: #{personality_forward_pallas.1} parent=0 // pred_check
    _
  $region59: #{personality_forward_pallas.1} parent=0 // pred_check_branch
    %1329 = sbr.rel (0) target = $region61
  $region60: #{personality_forward_pallas.1} parent=0 // pred_region
    _
  $region61: #{personality_forward_pallas.1} parent=0 // pred_fallthru
    _
  // Predicated region
  $region62: #{personality_forward_pallas.1} parent=0 // pred_check
    _
  $region63: #{personality_forward_pallas.1} parent=0 // pred_check_branch
    %1331 = sbr.rel (0) target = $region65
  $region64: #{personality_forward_pallas.1} parent=0 // pred_region
    _
  $region65: #{personality_forward_pallas.1} parent=0 // pred_fallthru
    _

</llo_original>
